<compile_context>
chip_gen: v5e
topology: v5e:2x2
jax: 0.10.0
libtpu: 0.0.40
codegen_flags: <defaults>
</compile_context>

<pallas_src>
import jax
import jax.numpy as jnp
from jax import lax
from jax.experimental import pallas as pl
from jax.experimental.pallas import tpu as pltpu

EPS = 1e-5  # nn.GroupNorm default eps

_PARAM_ORDER = ("g1", "be1", "w1a", "w1b", "b1a", "b1b",
                "wd", "bd", "g2", "be2", "wp", "bp")


# ------------------------------- kernel body --------------------------------

def _conv_module_kernel(x_ref, g1_ref, be1_ref, w1a_ref, w1b_ref, b1a_ref,
                        b1b_ref, wd_ref, bd_ref, g2_ref, be2_ref, wp_ref,
                        bp_ref, o_ref):
    depth = wd_ref.shape[0]
    K = wd_ref.shape[1]
    pad = K // 2
    mxu = w1a_ref.dtype                       # bf16 weights -> bf16 MXU operands

    # NCT block -> (Bt, T, C) compute layout.  The layout change is fused into
    # the kernel (per-sample 2-D transposes), so no standalone XLA transpose op
    # and no extra HBM round trip of the activation is needed.
    Bt = x_ref.shape[0]
    x0 = jnp.stack([x_ref[b].T for b in range(Bt)]).astype(jnp.float32)
    _, T, C = x0.shape

    # Conv-tap shifts along T (sublane axis): pltpu.roll + iota row mask that
    # zeroes the wrapped rows.  Shared by both convs and all layers.
    tpos = lax.broadcasted_iota(jnp.int32, (1, T, 1), 1)
    taps = []
    for dk in range(K):
        r = pad - dk                           # shifted[t] = y[t - r], 0 outside
        taps.append((r % T, (tpos >= r) & (tpos < T + r)))

    def shift_t(a, r_mod, mask):
        rolled = a if r_mod == 0 else pltpu.roll(a, r_mod, axis=1)
        return jnp.where(mask, rolled, 0.0)

    def layer(d, x):
        # --- GroupNorm(1, C): per-sample stats over (T, C), single pass ---
        mu = jnp.mean(x, axis=(1, 2), keepdims=True)
        ms = jnp.mean(x * x, axis=(1, 2), keepdims=True)
        y = (x - mu) * lax.rsqrt(ms - mu * mu + EPS)
        y = y * g1_ref[d] + be1_ref[d]                      # (1, C) affine

        # --- Conv1d(C -> 2H, k, padding=k//2): K accumulating bf16 MXU matmuls.
        # The GLU split is baked into separate value/gate weight slabs, so no
        # lane-axis split of a 2H-wide tensor is needed. ---
        w1a = w1a_ref[d]                                    # (K, C, H) bf16
        w1b = w1b_ref[d]
        za = zb = None
        for dk in range(K):
            r_mod, mask = taps[dk]
            ys = shift_t(y, r_mod, mask).astype(mxu).reshape(Bt * T, C)
            pa = jnp.dot(ys, w1a[dk], preferred_element_type=jnp.float32)
            pb = jnp.dot(ys, w1b[dk], preferred_element_type=jnp.float32)
            za = pa if za is None else za + pa
            zb = pb if zb is None else zb + pb
        H = za.shape[-1]
        za = za.reshape(Bt, T, H) + b1a_ref[d]
        zb = zb.reshape(Bt, T, H) + b1b_ref[d]

        # --- GLU (value * sigmoid(gate)) ---
        u = za * jax.nn.sigmoid(zb)

        # --- depthwise Conv1d(H -> H, k, groups=H): per-lane FIR along T ---
        wd = wd_ref[d]                                      # (K, 1, H) f32
        v = None
        for dk in range(K):
            r_mod, mask = taps[dk]
            term = shift_t(u, r_mod, mask) * wd[dk]
            v = term if v is None else v + term
        v = v + bd_ref[d]

        # --- GroupNorm(1, H), single-pass stats ---
        mu2 = jnp.mean(v, axis=(1, 2), keepdims=True)
        ms2 = jnp.mean(v * v, axis=(1, 2), keepdims=True)
        v = (v - mu2) * lax.rsqrt(ms2 - mu2 * mu2 + EPS)
        v = v * g2_ref[d] + be2_ref[d]

        # --- Swish -> pointwise Conv1d(H -> C, 1) -> residual add ---
        s = v * jax.nn.sigmoid(v)
        pw = jnp.dot(s.astype(mxu).reshape(Bt * T, H), wp_ref[d],
                     preferred_element_type=jnp.float32).reshape(Bt, T, C)
        return x + pw + bp_ref[d]

    # fori_loop (not a Python unroll) bounds live ranges to one layer.
    x = lax.fori_loop(0, depth, layer, x0)

    for b in range(Bt):                        # back to NCT, per-sample store
        o_ref[b] = x[b].T.astype(o_ref.dtype)


# --------------------------------- wrapper ----------------------------------

def conv_module_forward(x_nct, kparams, block_b=None):
    """Matches ConvolutionModule.forward; takes / returns PyTorch NCT layout."""
    B, C, T = x_nct.shape
    H = kparams["wd"].shape[-1]

    # ---- block_b: >= 4 grid steps when possible (pipelining + both TCs) ----
    if block_b is None:
        target_steps = min(B, 4)
        block_b = max(1, B // target_steps)
    while B % block_b:
        block_b -= 1

    # ---- explicit VMEM budget (v7x: 64 MiB physical, 32 MiB default scope) ----
    wbytes = sum(int(v.size) * v.dtype.itemsize for v in kparams.values())

    def _est(bb):
        io = 2 * 2 * bb * C * T * x_nct.dtype.itemsize   # dbl-buffered in + out
        live = bb * T * (5 * C + 10 * H) * 4             # rough f32 working set
        return io + live + wbytes

    budget = 40 * 1024 * 1024
    while block_b > 1 and _est(block_b) > budget:
        block_b -= 1
        while B % block_b:
            block_b -= 1

    def const_spec(arr):
        nd = arr.ndim
        # Constant index map (fetched once) + single-buffered: halves the
        # weights' VMEM footprint vs. default double-buffering.
        return pl.BlockSpec(arr.shape, lambda b, _nd=nd: (0,) * _nd,
                            pipeline_mode=pl.Buffered(1))

    in_specs = [pl.BlockSpec((block_b, C, T), lambda b: (b, 0, 0))]
    in_specs += [const_spec(kparams[k]) for k in _PARAM_ORDER]

    return pl.pallas_call(
        _conv_module_kernel,
        out_shape=jax.ShapeDtypeStruct((B, C, T), x_nct.dtype),
        grid=(B // block_b,),
        in_specs=in_specs,
        out_specs=pl.BlockSpec((block_b, C, T), lambda b: (b, 0, 0)),
        compiler_params=pltpu.CompilerParams(
            dimension_semantics=("parallel",),
            vmem_limit_bytes=48 * 1024 * 1024),
    )(x_nct, *[kparams[k] for k in _PARAM_ORDER])


# ----------------------------- parameter setup ------------------------------

def init_params(key, channels, depth=2, compress=4, kernel=3,
                mxu_dtype=jnp.bfloat16):
    H = int(channels / compress)
    per_layer = []
    for d in range(depth):
        ks = jax.random.split(jax.random.fold_in(key, d), 10)
        g1 = 1.0 + 0.1 * jax.random.normal(ks[0], (channels,), jnp.float32)
        be1 = 0.1 * jax.random.normal(ks[1], (channels,), jnp.float32)
        w1 = 0.3 * jax.random.normal(ks[2], (2 * H, channels, kernel), jnp.float32)
        b1 = 0.1 * jax.random.normal(ks[3], (2 * H,), jnp.float32)
        wd = 0.3 * jax.random.normal(ks[4], (H, 1, kernel), jnp.float32)
        bd = 0.1 * jax.random.normal(ks[5], (H,), jnp.float32)
        g2 = 1.0 + 0.1 * jax.random.normal(ks[6], (H,), jnp.float32)
        be2 = 0.1 * jax.random.normal(ks[7], (H,), jnp.float32)
        wp = 0.3 * jax.random.normal(ks[8], (channels, H, 1), jnp.float32)
        bp = 0.1 * jax.random.normal(ks[9], (channels,), jnp.float32)
        per_layer.append(dict(g1=g1, be1=be1, w1=w1, b1=b1, wd=wd, bd=bd,
                              g2=g2, be2=be2, wp=wp, bp=bp))

    def stack(fn):
        return jnp.stack([fn(p) for p in per_layer])

    # Stacked kernel-layout parameters (leading depth axis).  MXU weights bf16.
    kparams = dict(
        g1=stack(lambda p: p["g1"].reshape(1, channels)),
        be1=stack(lambda p: p["be1"].reshape(1, channels)),
        # Conv1d(C, 2H, K) weight (2H, C, K): split into GLU value/gate halves,
        # each laid out (K, C, H) so tap dk is a direct (C, H) MXU operand.
        w1a=stack(lambda p: jnp.transpose(p["w1"][:H], (2, 1, 0))).astype(mxu_dtype),
        w1b=stack(lambda p: jnp.transpose(p["w1"][H:], (2, 1, 0))).astype(mxu_dtype),
        b1a=stack(lambda p: p["b1"][:H].reshape(1, H)),
        b1b=stack(lambda p: p["b1"][H:].reshape(1, H)),
        # depthwise (H,1,K) -> (K, 1, H); stays f32 (element-wise FIR).
        wd=stack(lambda p: jnp.transpose(p["wd"][:, 0, :], (1, 0)).reshape(kernel, 1, H)),
        bd=stack(lambda p: p["bd"].reshape(1, H)),
        g2=stack(lambda p: p["g2"].reshape(1, H)),
        be2=stack(lambda p: p["be2"].reshape(1, H)),
        # pointwise (C,H,1) -> (H, C)
        wp=stack(lambda p: jnp.transpose(p["wp"][:, :, 0], (1, 0))).astype(mxu_dtype),
        bp=stack(lambda p: p["bp"].reshape(1, channels)),
    )
    return per_layer, kparams


# -------------------------- pure-JAX reference (NCT) ------------------------

def _group_norm1(x, gamma, beta):
    mu = jnp.mean(x, axis=(1, 2), keepdims=True)
    var = jnp.mean((x - mu) ** 2, axis=(1, 2), keepdims=True)
    xn = (x - mu) / jnp.sqrt(var + EPS)
    return xn * gamma[None, :, None] + beta[None, :, None]


def _conv1d(x, w, b, groups=1):
    pad = (w.shape[-1] - 1) // 2
    y = lax.conv_general_dilated(
        x, w, window_strides=(1,), padding=[(pad, pad)],
        dimension_numbers=("NCH", "OIH", "NCH"),
        feature_group_count=groups)
    return y + b[None, :, None]


def reference_forward(x, params_pt):
    for p in params_pt:
        y = _group_norm1(x, p["g1"], p["be1"])
        y = _conv1d(y, p["w1"], p["b1"])
        H = y.shape[1] // 2
        y = y[:, :H] * jax.nn.sigmoid(y[:, H:])                 # GLU(dim=1)
        y = _conv1d(y, p["wd"], p["bd"], groups=H)              # depthwise
        y = _group_norm1(y, p["g2"], p["be2"])
        y = y * jax.nn.sigmoid(y)                               # Swish
        y = _conv1d(y, p["wp"], p["bp"])                        # pointwise
        x = x + y
    return x


if __name__ == "__main__":
    B, C, T = 2, 16, 16            # channels=16, compress=4 -> hidden=4
    depth, compress, kernel = 2, 4, 3

    key = jax.random.PRNGKey(0)
    kx, kp = jax.random.split(key)
    x = jax.random.normal(kx, (B, C, T), jnp.float32)   # PyTorch NCT input

    params_pt, params_k = init_params(kp, C, depth, compress, kernel)

    out = conv_module_forward(x, params_k)
    out = jax.block_until_ready(out)

    ref = reference_forward(x, params_pt)
    assert out.shape == (B, C, T)
    # bf16 MXU operands (f32 accumulation) vs. an all-f32 reference -> relaxed
    # tolerance; structural errors would be O(1), far above this threshold.
    max_err = float(jnp.max(jnp.abs(out - ref)))
    assert jnp.allclose(out, ref, rtol=3e-2, atol=3e-2), max_err

    print("KERNEL_OK")
</pallas_src>

<mosaic_0001>
module attributes {stable_mosaic.version = 11 : i64} {
  func.func @_conv_module_kernel(%arg0: i32, %arg1: memref<1x16x16xf32, #tpu.memory_space<vmem>>, %arg2: memref<2x1x16xf32, #tpu.memory_space<vmem>>, %arg3: memref<2x1x16xf32, #tpu.memory_space<vmem>>, %arg4: memref<2x3x16x4xbf16, #tpu.memory_space<vmem>>, %arg5: memref<2x3x16x4xbf16, #tpu.memory_space<vmem>>, %arg6: memref<2x1x4xf32, #tpu.memory_space<vmem>>, %arg7: memref<2x1x4xf32, #tpu.memory_space<vmem>>, %arg8: memref<2x3x1x4xf32, #tpu.memory_space<vmem>>, %arg9: memref<2x1x4xf32, #tpu.memory_space<vmem>>, %arg10: memref<2x1x4xf32, #tpu.memory_space<vmem>>, %arg11: memref<2x1x4xf32, #tpu.memory_space<vmem>>, %arg12: memref<2x4x16xbf16, #tpu.memory_space<vmem>>, %arg13: memref<2x1x16xf32, #tpu.memory_space<vmem>>, %arg14: memref<1x16x16xf32, #tpu.memory_space<vmem>>) attributes {dimension_semantics = [#tpu.dimension_semantics<parallel>], iteration_bounds = array<i64: 2>, scalar_prefetch = 0 : i64, scratch_operands = 0 : i64, tpu.core_type = #tpu.core_type<tc>, window_params = [{transform_indices = @transform_0, window_bounds = array<i64: 1, 16, 16>}, {pipeline_mode = #tpu.pipeline_mode<synchronous>, transform_indices = @transform_1, window_bounds = array<i64: 2, 1, 16>}, {pipeline_mode = #tpu.pipeline_mode<synchronous>, transform_indices = @transform_2, window_bounds = array<i64: 2, 1, 16>}, {pipeline_mode = #tpu.pipeline_mode<synchronous>, transform_indices = @transform_3, window_bounds = array<i64: 2, 3, 16, 4>}, {pipeline_mode = #tpu.pipeline_mode<synchronous>, transform_indices = @transform_4, window_bounds = array<i64: 2, 3, 16, 4>}, {pipeline_mode = #tpu.pipeline_mode<synchronous>, transform_indices = @transform_5, window_bounds = array<i64: 2, 1, 4>}, {pipeline_mode = #tpu.pipeline_mode<synchronous>, transform_indices = @transform_6, window_bounds = array<i64: 2, 1, 4>}, {pipeline_mode = #tpu.pipeline_mode<synchronous>, transform_indices = @transform_7, window_bounds = array<i64: 2, 3, 1, 4>}, {pipeline_mode = #tpu.pipeline_mode<synchronous>, transform_indices = @transform_8, window_bounds = array<i64: 2, 1, 4>}, {pipeline_mode = #tpu.pipeline_mode<synchronous>, transform_indices = @transform_9, window_bounds = array<i64: 2, 1, 4>}, {pipeline_mode = #tpu.pipeline_mode<synchronous>, transform_indices = @transform_10, window_bounds = array<i64: 2, 1, 4>}, {pipeline_mode = #tpu.pipeline_mode<synchronous>, transform_indices = @transform_11, window_bounds = array<i64: 2, 4, 16>}, {pipeline_mode = #tpu.pipeline_mode<synchronous>, transform_indices = @transform_12, window_bounds = array<i64: 2, 1, 16>}, {transform_indices = @transform_13, window_bounds = array<i64: 1, 16, 16>}]} {
    %c0 = arith.constant 0 : index
    %c0_0 = arith.constant 0 : index
    %c0_1 = arith.constant 0 : index
    %0 = vector.load %arg1[%c0, %c0_0, %c0_1] : memref<1x16x16xf32, #tpu.memory_space<vmem>>, vector<1x16x16xf32>
    %1 = vector.shape_cast %0 : vector<1x16x16xf32> to vector<16x16xf32>
    %2 = tpu.transpose %1, [1, 0] : vector<16x16xf32> -> vector<16x16xf32>
    %3 = vector.shape_cast %2 : vector<16x16xf32> to vector<1x16x16xf32>
    %4 = tpu.iota {dimensions = array<i32: 1>} : vector<1x16x1xi32>
    %c1_i32 = arith.constant 1 : i32
    %5 = vector.broadcast %c1_i32 : i32 to vector<1x16x1xi32>
    %6 = arith.cmpi sge, %4, %5 : vector<1x16x1xi32>
    %c17_i32 = arith.constant 17 : i32
    %7 = vector.broadcast %c17_i32 : i32 to vector<1x16x1xi32>
    %8 = arith.cmpi slt, %4, %7 : vector<1x16x1xi32>
    %9 = arith.andi %6, %8 : vector<1x16x1xi1>
    %c0_i32 = arith.constant 0 : i32
    %10 = vector.broadcast %c0_i32 : i32 to vector<1x16x1xi32>
    %11 = arith.cmpi sge, %4, %10 : vector<1x16x1xi32>
    %c16_i32 = arith.constant 16 : i32
    %12 = vector.broadcast %c16_i32 : i32 to vector<1x16x1xi32>
    %13 = arith.cmpi slt, %4, %12 : vector<1x16x1xi32>
    %14 = arith.andi %11, %13 : vector<1x16x1xi1>
    %c-1_i32 = arith.constant -1 : i32
    %15 = vector.broadcast %c-1_i32 : i32 to vector<1x16x1xi32>
    %16 = arith.cmpi sge, %4, %15 : vector<1x16x1xi32>
    %c15_i32 = arith.constant 15 : i32
    %17 = vector.broadcast %c15_i32 : i32 to vector<1x16x1xi32>
    %18 = arith.cmpi slt, %4, %17 : vector<1x16x1xi32>
    %19 = arith.andi %16, %18 : vector<1x16x1xi1>
    %c0_i32_2 = arith.constant 0 : i32
    %c2_i32 = arith.constant 2 : i32
    %20 = arith.addi %c0_i32_2, %c2_i32 : i32
    %c1_i32_3 = arith.constant 1 : i32
    %21 = scf.for %arg15 = %c0_i32_2 to %20 step %c1_i32_3 iter_args(%arg16 = %3) -> (vector<1x16x16xf32>)  : i32 {
      %cst = arith.constant dense<0.000000e+00> : vector<1xf32>
      %27 = vector.multi_reduction <add>, %arg16, %cst [1, 2] : vector<1x16x16xf32> to vector<1xf32>
      %28 = vector.shape_cast %27 : vector<1xf32> to vector<1x1x1xf32>
      %cst_8 = arith.constant 2.560000e+02 : f32
      %29 = vector.broadcast %cst_8 : f32 to vector<1x1x1xf32>
      %30 = arith.divf %28, %29 : vector<1x1x1xf32>
      %31 = arith.mulf %arg16, %arg16 : vector<1x16x16xf32>
      %cst_9 = arith.constant dense<0.000000e+00> : vector<1xf32>
      %32 = vector.multi_reduction <add>, %31, %cst_9 [1, 2] : vector<1x16x16xf32> to vector<1xf32>
      %33 = vector.shape_cast %32 : vector<1xf32> to vector<1x1x1xf32>
      %cst_10 = arith.constant 2.560000e+02 : f32
      %34 = vector.broadcast %cst_10 : f32 to vector<1x1x1xf32>
      %35 = arith.divf %33, %34 : vector<1x1x1xf32>
      %36 = vector.broadcast %30 : vector<1x1x1xf32> to vector<1x16x16xf32>
      %37 = arith.subf %arg16, %36 : vector<1x16x16xf32>
      %38 = arith.mulf %30, %30 : vector<1x1x1xf32>
      %39 = arith.subf %35, %38 : vector<1x1x1xf32>
      %cst_11 = arith.constant 9.99999974E-6 : f32
      %40 = vector.broadcast %cst_11 : f32 to vector<1x1x1xf32>
      %41 = arith.addf %39, %40 : vector<1x1x1xf32>
      %42 = math.rsqrt %41 : vector<1x1x1xf32>
      %43 = vector.broadcast %42 : vector<1x1x1xf32> to vector<1x16x16xf32>
      %44 = arith.mulf %37, %43 : vector<1x16x16xf32>
      %45 = arith.index_cast %arg15 : i32 to index
      %c0_12 = arith.constant 0 : index
      %c0_13 = arith.constant 0 : index
      %46 = vector.load %arg2[%45, %c0_12, %c0_13] : memref<2x1x16xf32, #tpu.memory_space<vmem>>, vector<1x1x16xf32>
      %47 = vector.shape_cast %46 : vector<1x1x16xf32> to vector<1x16xf32>
      %48 = vector.shape_cast %47 : vector<1x16xf32> to vector<1x1x16xf32>
      %49 = vector.broadcast %48 : vector<1x1x16xf32> to vector<1x16x16xf32>
      %50 = arith.mulf %44, %49 : vector<1x16x16xf32>
      %51 = arith.index_cast %arg15 : i32 to index
      %c0_14 = arith.constant 0 : index
      %c0_15 = arith.constant 0 : index
      %52 = vector.load %arg3[%51, %c0_14, %c0_15] : memref<2x1x16xf32, #tpu.memory_space<vmem>>, vector<1x1x16xf32>
      %53 = vector.shape_cast %52 : vector<1x1x16xf32> to vector<1x16xf32>
      %54 = vector.shape_cast %53 : vector<1x16xf32> to vector<1x1x16xf32>
      %55 = vector.broadcast %54 : vector<1x1x16xf32> to vector<1x16x16xf32>
      %56 = arith.addf %50, %55 : vector<1x16x16xf32>
      %57 = arith.index_cast %arg15 : i32 to index
      %c0_16 = arith.constant 0 : index
      %c0_17 = arith.constant 0 : index
      %c0_18 = arith.constant 0 : index
      %58 = vector.load %arg4[%57, %c0_16, %c0_17, %c0_18] : memref<2x3x16x4xbf16, #tpu.memory_space<vmem>>, vector<1x3x16x4xbf16>
      %59 = vector.shape_cast %58 : vector<1x3x16x4xbf16> to vector<3x16x4xbf16>
      %60 = arith.index_cast %arg15 : i32 to index
      %c0_19 = arith.constant 0 : index
      %c0_20 = arith.constant 0 : index
      %c0_21 = arith.constant 0 : index
      %61 = vector.load %arg5[%60, %c0_19, %c0_20, %c0_21] : memref<2x3x16x4xbf16, #tpu.memory_space<vmem>>, vector<1x3x16x4xbf16>
      %62 = vector.shape_cast %61 : vector<1x3x16x4xbf16> to vector<3x16x4xbf16>
      %c1_i32_22 = arith.constant 1 : i32
      %63 = tpu.dynamic_rotate %56 by %c1_i32_22 dim 1 : vector<1x16x16xf32>, i32 -> vector<1x16x16xf32>
      %cst_23 = arith.constant 0.000000e+00 : f32
      %64 = vector.shape_cast %9 : vector<1x16x1xi1> to vector<1x16x1xi1>
      %65 = vector.broadcast %64 : vector<1x16x1xi1> to vector<1x16x16xi1>
      %66 = vector.broadcast %cst_23 : f32 to vector<1x16x16xf32>
      %67 = arith.select %65, %63, %66 : vector<1x16x16xi1>, vector<1x16x16xf32>
      %68 = arith.truncf %67 : vector<1x16x16xf32> to vector<1x16x16xbf16>
      %69 = vector.shape_cast %68 : vector<1x16x16xbf16> to vector<16x16xbf16>
      %70 = vector.extract_strided_slice %59 {offsets = [0, 0, 0], sizes = [1, 16, 4], strides = [1, 1, 1]} : vector<3x16x4xbf16> to vector<1x16x4xbf16>
      %71 = vector.shape_cast %70 : vector<1x16x4xbf16> to vector<16x4xbf16>
      %cst_24 = arith.constant dense<0.000000e+00> : vector<16x4xf32>
      %72 = tpu.matmul %69, %71, %cst_24 {dimension_numbers = #tpu.dot_dimension_numbers<[1], [0], [0], [1], [0, 0, 1, 1], [], []>} : vector<16x16xbf16>, vector<16x4xbf16>, vector<16x4xf32> -> vector<16x4xf32>
      %73 = vector.extract_strided_slice %62 {offsets = [0, 0, 0], sizes = [1, 16, 4], strides = [1, 1, 1]} : vector<3x16x4xbf16> to vector<1x16x4xbf16>
      %74 = vector.shape_cast %73 : vector<1x16x4xbf16> to vector<16x4xbf16>
      %cst_25 = arith.constant dense<0.000000e+00> : vector<16x4xf32>
      %75 = tpu.matmul %69, %74, %cst_25 {dimension_numbers = #tpu.dot_dimension_numbers<[1], [0], [0], [1], [0, 0, 1, 1], [], []>} : vector<16x16xbf16>, vector<16x4xbf16>, vector<16x4xf32> -> vector<16x4xf32>
      %cst_26 = arith.constant 0.000000e+00 : f32
      %76 = vector.shape_cast %14 : vector<1x16x1xi1> to vector<1x16x1xi1>
      %77 = vector.broadcast %76 : vector<1x16x1xi1> to vector<1x16x16xi1>
      %78 = vector.broadcast %cst_26 : f32 to vector<1x16x16xf32>
      %79 = arith.select %77, %56, %78 : vector<1x16x16xi1>, vector<1x16x16xf32>
      %80 = arith.truncf %79 : vector<1x16x16xf32> to vector<1x16x16xbf16>
      %81 = vector.shape_cast %80 : vector<1x16x16xbf16> to vector<16x16xbf16>
      %82 = vector.extract_strided_slice %59 {offsets = [1, 0, 0], sizes = [1, 16, 4], strides = [1, 1, 1]} : vector<3x16x4xbf16> to vector<1x16x4xbf16>
      %83 = vector.shape_cast %82 : vector<1x16x4xbf16> to vector<16x4xbf16>
      %cst_27 = arith.constant dense<0.000000e+00> : vector<16x4xf32>
      %84 = tpu.matmul %81, %83, %cst_27 {dimension_numbers = #tpu.dot_dimension_numbers<[1], [0], [0], [1], [0, 0, 1, 1], [], []>} : vector<16x16xbf16>, vector<16x4xbf16>, vector<16x4xf32> -> vector<16x4xf32>
      %85 = vector.extract_strided_slice %62 {offsets = [1, 0, 0], sizes = [1, 16, 4], strides = [1, 1, 1]} : vector<3x16x4xbf16> to vector<1x16x4xbf16>
      %86 = vector.shape_cast %85 : vector<1x16x4xbf16> to vector<16x4xbf16>
      %cst_28 = arith.constant dense<0.000000e+00> : vector<16x4xf32>
      %87 = tpu.matmul %81, %86, %cst_28 {dimension_numbers = #tpu.dot_dimension_numbers<[1], [0], [0], [1], [0, 0, 1, 1], [], []>} : vector<16x16xbf16>, vector<16x4xbf16>, vector<16x4xf32> -> vector<16x4xf32>
      %88 = arith.addf %72, %84 : vector<16x4xf32>
      %89 = arith.addf %75, %87 : vector<16x4xf32>
      %c15_i32_29 = arith.constant 15 : i32
      %90 = tpu.dynamic_rotate %56 by %c15_i32_29 dim 1 : vector<1x16x16xf32>, i32 -> vector<1x16x16xf32>
      %cst_30 = arith.constant 0.000000e+00 : f32
      %91 = vector.shape_cast %19 : vector<1x16x1xi1> to vector<1x16x1xi1>
      %92 = vector.broadcast %91 : vector<1x16x1xi1> to vector<1x16x16xi1>
      %93 = vector.broadcast %cst_30 : f32 to vector<1x16x16xf32>
      %94 = arith.select %92, %90, %93 : vector<1x16x16xi1>, vector<1x16x16xf32>
      %95 = arith.truncf %94 : vector<1x16x16xf32> to vector<1x16x16xbf16>
      %96 = vector.shape_cast %95 : vector<1x16x16xbf16> to vector<16x16xbf16>
      %97 = vector.extract_strided_slice %59 {offsets = [2, 0, 0], sizes = [1, 16, 4], strides = [1, 1, 1]} : vector<3x16x4xbf16> to vector<1x16x4xbf16>
      %98 = vector.shape_cast %97 : vector<1x16x4xbf16> to vector<16x4xbf16>
      %cst_31 = arith.constant dense<0.000000e+00> : vector<16x4xf32>
      %99 = tpu.matmul %96, %98, %cst_31 {dimension_numbers = #tpu.dot_dimension_numbers<[1], [0], [0], [1], [0, 0, 1, 1], [], []>} : vector<16x16xbf16>, vector<16x4xbf16>, vector<16x4xf32> -> vector<16x4xf32>
      %100 = vector.extract_strided_slice %62 {offsets = [2, 0, 0], sizes = [1, 16, 4], strides = [1, 1, 1]} : vector<3x16x4xbf16> to vector<1x16x4xbf16>
      %101 = vector.shape_cast %100 : vector<1x16x4xbf16> to vector<16x4xbf16>
      %cst_32 = arith.constant dense<0.000000e+00> : vector<16x4xf32>
      %102 = tpu.matmul %96, %101, %cst_32 {dimension_numbers = #tpu.dot_dimension_numbers<[1], [0], [0], [1], [0, 0, 1, 1], [], []>} : vector<16x16xbf16>, vector<16x4xbf16>, vector<16x4xf32> -> vector<16x4xf32>
      %103 = arith.addf %88, %99 : vector<16x4xf32>
      %104 = arith.addf %89, %102 : vector<16x4xf32>
      %105 = vector.shape_cast %103 : vector<16x4xf32> to vector<1x16x4xf32>
      %106 = arith.index_cast %arg15 : i32 to index
      %c0_33 = arith.constant 0 : index
      %c0_34 = arith.constant 0 : index
      %107 = vector.load %arg6[%106, %c0_33, %c0_34] : memref<2x1x4xf32, #tpu.memory_space<vmem>>, vector<1x1x4xf32>
      %108 = vector.shape_cast %107 : vector<1x1x4xf32> to vector<1x4xf32>
      %109 = vector.shape_cast %108 : vector<1x4xf32> to vector<1x1x4xf32>
      %110 = vector.broadcast %109 : vector<1x1x4xf32> to vector<1x16x4xf32>
      %111 = arith.addf %105, %110 : vector<1x16x4xf32>
      %112 = vector.shape_cast %104 : vector<16x4xf32> to vector<1x16x4xf32>
      %113 = arith.index_cast %arg15 : i32 to index
      %c0_35 = arith.constant 0 : index
      %c0_36 = arith.constant 0 : index
      %114 = vector.load %arg7[%113, %c0_35, %c0_36] : memref<2x1x4xf32, #tpu.memory_space<vmem>>, vector<1x1x4xf32>
      %115 = vector.shape_cast %114 : vector<1x1x4xf32> to vector<1x4xf32>
      %116 = vector.shape_cast %115 : vector<1x4xf32> to vector<1x1x4xf32>
      %117 = vector.broadcast %116 : vector<1x1x4xf32> to vector<1x16x4xf32>
      %118 = arith.addf %112, %117 : vector<1x16x4xf32>
      %119 = arith.negf %118 : vector<1x16x4xf32>
      %120 = math.exp %119 : vector<1x16x4xf32>
      %cst_37 = arith.constant 1.000000e+00 : f32
      %121 = vector.broadcast %cst_37 : f32 to vector<1x16x4xf32>
      %122 = arith.addf %121, %120 : vector<1x16x4xf32>
      %123 = arith.divf %121, %122 : vector<1x16x4xf32>
      %124 = arith.mulf %111, %123 : vector<1x16x4xf32>
      %125 = arith.index_cast %arg15 : i32 to index
      %c0_38 = arith.constant 0 : index
      %c0_39 = arith.constant 0 : index
      %c0_40 = arith.constant 0 : index
      %126 = vector.load %arg8[%125, %c0_38, %c0_39, %c0_40] : memref<2x3x1x4xf32, #tpu.memory_space<vmem>>, vector<1x3x1x4xf32>
      %127 = vector.shape_cast %126 : vector<1x3x1x4xf32> to vector<3x1x4xf32>
      %c1_i32_41 = arith.constant 1 : i32
      %128 = tpu.dynamic_rotate %124 by %c1_i32_41 dim 1 : vector<1x16x4xf32>, i32 -> vector<1x16x4xf32>
      %cst_42 = arith.constant 0.000000e+00 : f32
      %129 = vector.shape_cast %9 : vector<1x16x1xi1> to vector<1x16x1xi1>
      %130 = vector.broadcast %129 : vector<1x16x1xi1> to vector<1x16x4xi1>
      %131 = vector.broadcast %cst_42 : f32 to vector<1x16x4xf32>
      %132 = arith.select %130, %128, %131 : vector<1x16x4xi1>, vector<1x16x4xf32>
      %133 = vector.extract_strided_slice %127 {offsets = [0, 0, 0], sizes = [1, 1, 4], strides = [1, 1, 1]} : vector<3x1x4xf32> to vector<1x1x4xf32>
      %134 = vector.shape_cast %133 : vector<1x1x4xf32> to vector<1x4xf32>
      %135 = vector.shape_cast %134 : vector<1x4xf32> to vector<1x1x4xf32>
      %136 = vector.broadcast %135 : vector<1x1x4xf32> to vector<1x16x4xf32>
      %137 = arith.mulf %132, %136 : vector<1x16x4xf32>
      %cst_43 = arith.constant 0.000000e+00 : f32
      %138 = vector.shape_cast %14 : vector<1x16x1xi1> to vector<1x16x1xi1>
      %139 = vector.broadcast %138 : vector<1x16x1xi1> to vector<1x16x4xi1>
      %140 = vector.broadcast %cst_43 : f32 to vector<1x16x4xf32>
      %141 = arith.select %139, %124, %140 : vector<1x16x4xi1>, vector<1x16x4xf32>
      %142 = vector.extract_strided_slice %127 {offsets = [1, 0, 0], sizes = [1, 1, 4], strides = [1, 1, 1]} : vector<3x1x4xf32> to vector<1x1x4xf32>
      %143 = vector.shape_cast %142 : vector<1x1x4xf32> to vector<1x4xf32>
      %144 = vector.shape_cast %143 : vector<1x4xf32> to vector<1x1x4xf32>
      %145 = vector.broadcast %144 : vector<1x1x4xf32> to vector<1x16x4xf32>
      %146 = arith.mulf %141, %145 : vector<1x16x4xf32>
      %147 = arith.addf %137, %146 : vector<1x16x4xf32>
      %c15_i32_44 = arith.constant 15 : i32
      %148 = tpu.dynamic_rotate %124 by %c15_i32_44 dim 1 : vector<1x16x4xf32>, i32 -> vector<1x16x4xf32>
      %cst_45 = arith.constant 0.000000e+00 : f32
      %149 = vector.shape_cast %19 : vector<1x16x1xi1> to vector<1x16x1xi1>
      %150 = vector.broadcast %149 : vector<1x16x1xi1> to vector<1x16x4xi1>
      %151 = vector.broadcast %cst_45 : f32 to vector<1x16x4xf32>
      %152 = arith.select %150, %148, %151 : vector<1x16x4xi1>, vector<1x16x4xf32>
      %153 = vector.extract_strided_slice %127 {offsets = [2, 0, 0], sizes = [1, 1, 4], strides = [1, 1, 1]} : vector<3x1x4xf32> to vector<1x1x4xf32>
      %154 = vector.shape_cast %153 : vector<1x1x4xf32> to vector<1x4xf32>
      %155 = vector.shape_cast %154 : vector<1x4xf32> to vector<1x1x4xf32>
      %156 = vector.broadcast %155 : vector<1x1x4xf32> to vector<1x16x4xf32>
      %157 = arith.mulf %152, %156 : vector<1x16x4xf32>
      %158 = arith.addf %147, %157 : vector<1x16x4xf32>
      %159 = arith.index_cast %arg15 : i32 to index
      %c0_46 = arith.constant 0 : index
      %c0_47 = arith.constant 0 : index
      %160 = vector.load %arg9[%159, %c0_46, %c0_47] : memref<2x1x4xf32, #tpu.memory_space<vmem>>, vector<1x1x4xf32>
      %161 = vector.shape_cast %160 : vector<1x1x4xf32> to vector<1x4xf32>
      %162 = vector.shape_cast %161 : vector<1x4xf32> to vector<1x1x4xf32>
      %163 = vector.broadcast %162 : vector<1x1x4xf32> to vector<1x16x4xf32>
      %164 = arith.addf %158, %163 : vector<1x16x4xf32>
      %cst_48 = arith.constant dense<0.000000e+00> : vector<1xf32>
      %165 = vector.multi_reduction <add>, %164, %cst_48 [1, 2] : vector<1x16x4xf32> to vector<1xf32>
      %166 = vector.shape_cast %165 : vector<1xf32> to vector<1x1x1xf32>
      %cst_49 = arith.constant 6.400000e+01 : f32
      %167 = vector.broadcast %cst_49 : f32 to vector<1x1x1xf32>
      %168 = arith.divf %166, %167 : vector<1x1x1xf32>
      %169 = arith.mulf %164, %164 : vector<1x16x4xf32>
      %cst_50 = arith.constant dense<0.000000e+00> : vector<1xf32>
      %170 = vector.multi_reduction <add>, %169, %cst_50 [1, 2] : vector<1x16x4xf32> to vector<1xf32>
      %171 = vector.shape_cast %170 : vector<1xf32> to vector<1x1x1xf32>
      %cst_51 = arith.constant 6.400000e+01 : f32
      %172 = vector.broadcast %cst_51 : f32 to vector<1x1x1xf32>
      %173 = arith.divf %171, %172 : vector<1x1x1xf32>
      %174 = vector.broadcast %168 : vector<1x1x1xf32> to vector<1x16x4xf32>
      %175 = arith.subf %164, %174 : vector<1x16x4xf32>
      %176 = arith.mulf %168, %168 : vector<1x1x1xf32>
      %177 = arith.subf %173, %176 : vector<1x1x1xf32>
      %cst_52 = arith.constant 9.99999974E-6 : f32
      %178 = vector.broadcast %cst_52 : f32 to vector<1x1x1xf32>
      %179 = arith.addf %177, %178 : vector<1x1x1xf32>
      %180 = math.rsqrt %179 : vector<1x1x1xf32>
      %181 = vector.broadcast %180 : vector<1x1x1xf32> to vector<1x16x4xf32>
      %182 = arith.mulf %175, %181 : vector<1x16x4xf32>
      %183 = arith.index_cast %arg15 : i32 to index
      %c0_53 = arith.constant 0 : index
      %c0_54 = arith.constant 0 : index
      %184 = vector.load %arg10[%183, %c0_53, %c0_54] : memref<2x1x4xf32, #tpu.memory_space<vmem>>, vector<1x1x4xf32>
      %185 = vector.shape_cast %184 : vector<1x1x4xf32> to vector<1x4xf32>
      %186 = vector.shape_cast %185 : vector<1x4xf32> to vector<1x1x4xf32>
      %187 = vector.broadcast %186 : vector<1x1x4xf32> to vector<1x16x4xf32>
      %188 = arith.mulf %182, %187 : vector<1x16x4xf32>
      %189 = arith.index_cast %arg15 : i32 to index
      %c0_55 = arith.constant 0 : index
      %c0_56 = arith.constant 0 : index
      %190 = vector.load %arg11[%189, %c0_55, %c0_56] : memref<2x1x4xf32, #tpu.memory_space<vmem>>, vector<1x1x4xf32>
      %191 = vector.shape_cast %190 : vector<1x1x4xf32> to vector<1x4xf32>
      %192 = vector.shape_cast %191 : vector<1x4xf32> to vector<1x1x4xf32>
      %193 = vector.broadcast %192 : vector<1x1x4xf32> to vector<1x16x4xf32>
      %194 = arith.addf %188, %193 : vector<1x16x4xf32>
      %195 = arith.negf %194 : vector<1x16x4xf32>
      %196 = math.exp %195 : vector<1x16x4xf32>
      %cst_57 = arith.constant 1.000000e+00 : f32
      %197 = vector.broadcast %cst_57 : f32 to vector<1x16x4xf32>
      %198 = arith.addf %197, %196 : vector<1x16x4xf32>
      %199 = arith.divf %197, %198 : vector<1x16x4xf32>
      %200 = arith.mulf %194, %199 : vector<1x16x4xf32>
      %201 = arith.truncf %200 : vector<1x16x4xf32> to vector<1x16x4xbf16>
      %202 = vector.shape_cast %201 : vector<1x16x4xbf16> to vector<16x4xbf16>
      %203 = arith.index_cast %arg15 : i32 to index
      %c0_58 = arith.constant 0 : index
      %c0_59 = arith.constant 0 : index
      %204 = vector.load %arg12[%203, %c0_58, %c0_59] : memref<2x4x16xbf16, #tpu.memory_space<vmem>>, vector<1x4x16xbf16>
      %205 = vector.shape_cast %204 : vector<1x4x16xbf16> to vector<4x16xbf16>
      %cst_60 = arith.constant dense<0.000000e+00> : vector<16x16xf32>
      %206 = tpu.matmul %202, %205, %cst_60 {dimension_numbers = #tpu.dot_dimension_numbers<[1], [0], [0], [1], [0, 0, 1, 1], [], []>} : vector<16x4xbf16>, vector<4x16xbf16>, vector<16x16xf32> -> vector<16x16xf32>
      %207 = vector.shape_cast %206 : vector<16x16xf32> to vector<1x16x16xf32>
      %208 = arith.addf %arg16, %207 : vector<1x16x16xf32>
      %209 = arith.index_cast %arg15 : i32 to index
      %c0_61 = arith.constant 0 : index
      %c0_62 = arith.constant 0 : index
      %210 = vector.load %arg13[%209, %c0_61, %c0_62] : memref<2x1x16xf32, #tpu.memory_space<vmem>>, vector<1x1x16xf32>
      %211 = vector.shape_cast %210 : vector<1x1x16xf32> to vector<1x16xf32>
      %212 = vector.shape_cast %211 : vector<1x16xf32> to vector<1x1x16xf32>
      %213 = vector.broadcast %212 : vector<1x1x16xf32> to vector<1x16x16xf32>
      %214 = arith.addf %208, %213 : vector<1x16x16xf32>
      scf.yield %214 : vector<1x16x16xf32>
    }
    %c2_i32_4 = arith.constant 2 : i32
    %22 = vector.shape_cast %21 : vector<1x16x16xf32> to vector<16x16xf32>
    %23 = tpu.transpose %22, [1, 0] : vector<16x16xf32> -> vector<16x16xf32>
    %c0_5 = arith.constant 0 : index
    %c0_6 = arith.constant 0 : index
    %c0_7 = arith.constant 0 : index
    %24 = vector.load %arg14[%c0_5, %c0_6, %c0_7] : memref<1x16x16xf32, #tpu.memory_space<vmem>>, vector<1x16x16xf32>
    %25 = vector.shape_cast %24 : vector<1x16x16xf32> to vector<16x16xf32>
    %26 = vector.shape_cast %23 : vector<16x16xf32> to vector<1x16x16xf32>
    tpu.vector_store %arg14[%c0_5, %c0_6, %c0_7], %26 {strides = array<i32>} : memref<1x16x16xf32, #tpu.memory_space<vmem>>, vector<1x16x16xf32>,
    return
  }
  func.func @transform_0(%arg0: i32) -> (i32, i32, i32) {
    %c0_i32 = arith.constant 0 : i32
    %c0_i32_0 = arith.constant 0 : i32
    %c0_i32_1 = arith.constant 0 : i32
    return %arg0, %c0_i32, %c0_i32_0 : i32, i32, i32
  }
  func.func @transform_1(%arg0: i32) -> (i32, i32, i32) {
    %c0_i32 = arith.constant 0 : i32
    %c0_i32_0 = arith.constant 0 : i32
    %c0_i32_1 = arith.constant 0 : i32
    %c0_i32_2 = arith.constant 0 : i32
    return %c0_i32, %c0_i32_0, %c0_i32_1 : i32, i32, i32
  }
  func.func @transform_2(%arg0: i32) -> (i32, i32, i32) {
    %c0_i32 = arith.constant 0 : i32
    %c0_i32_0 = arith.constant 0 : i32
    %c0_i32_1 = arith.constant 0 : i32
    %c0_i32_2 = arith.constant 0 : i32
    return %c0_i32, %c0_i32_0, %c0_i32_1 : i32, i32, i32
  }
  func.func @transform_3(%arg0: i32) -> (i32, i32, i32, i32) {
    %c0_i32 = arith.constant 0 : i32
    %c0_i32_0 = arith.constant 0 : i32
    %c0_i32_1 = arith.constant 0 : i32
    %c0_i32_2 = arith.constant 0 : i32
    %c0_i32_3 = arith.constant 0 : i32
    return %c0_i32, %c0_i32_0, %c0_i32_1, %c0_i32_2 : i32, i32, i32, i32
  }
  func.func @transform_4(%arg0: i32) -> (i32, i32, i32, i32) {
    %c0_i32 = arith.constant 0 : i32
    %c0_i32_0 = arith.constant 0 : i32
    %c0_i32_1 = arith.constant 0 : i32
    %c0_i32_2 = arith.constant 0 : i32
    %c0_i32_3 = arith.constant 0 : i32
    return %c0_i32, %c0_i32_0, %c0_i32_1, %c0_i32_2 : i32, i32, i32, i32
  }
  func.func @transform_5(%arg0: i32) -> (i32, i32, i32) {
    %c0_i32 = arith.constant 0 : i32
    %c0_i32_0 = arith.constant 0 : i32
    %c0_i32_1 = arith.constant 0 : i32
    %c0_i32_2 = arith.constant 0 : i32
    return %c0_i32, %c0_i32_0, %c0_i32_1 : i32, i32, i32
  }
  func.func @transform_6(%arg0: i32) -> (i32, i32, i32) {
    %c0_i32 = arith.constant 0 : i32
    %c0_i32_0 = arith.constant 0 : i32
    %c0_i32_1 = arith.constant 0 : i32
    %c0_i32_2 = arith.constant 0 : i32
    return %c0_i32, %c0_i32_0, %c0_i32_1 : i32, i32, i32
  }
  func.func @transform_7(%arg0: i32) -> (i32, i32, i32, i32) {
    %c0_i32 = arith.constant 0 : i32
    %c0_i32_0 = arith.constant 0 : i32
    %c0_i32_1 = arith.constant 0 : i32
    %c0_i32_2 = arith.constant 0 : i32
    %c0_i32_3 = arith.constant 0 : i32
    return %c0_i32, %c0_i32_0, %c0_i32_1, %c0_i32_2 : i32, i32, i32, i32
  }
  func.func @transform_8(%arg0: i32) -> (i32, i32, i32) {
    %c0_i32 = arith.constant 0 : i32
    %c0_i32_0 = arith.constant 0 : i32
    %c0_i32_1 = arith.constant 0 : i32
    %c0_i32_2 = arith.constant 0 : i32
    return %c0_i32, %c0_i32_0, %c0_i32_1 : i32, i32, i32
  }
  func.func @transform_9(%arg0: i32) -> (i32, i32, i32) {
    %c0_i32 = arith.constant 0 : i32
    %c0_i32_0 = arith.constant 0 : i32
    %c0_i32_1 = arith.constant 0 : i32
    %c0_i32_2 = arith.constant 0 : i32
    return %c0_i32, %c0_i32_0, %c0_i32_1 : i32, i32, i32
  }
  func.func @transform_10(%arg0: i32) -> (i32, i32, i32) {
    %c0_i32 = arith.constant 0 : i32
    %c0_i32_0 = arith.constant 0 : i32
    %c0_i32_1 = arith.constant 0 : i32
    %c0_i32_2 = arith.constant 0 : i32
    return %c0_i32, %c0_i32_0, %c0_i32_1 : i32, i32, i32
  }
  func.func @transform_11(%arg0: i32) -> (i32, i32, i32) {
    %c0_i32 = arith.constant 0 : i32
    %c0_i32_0 = arith.constant 0 : i32
    %c0_i32_1 = arith.constant 0 : i32
    %c0_i32_2 = arith.constant 0 : i32
    return %c0_i32, %c0_i32_0, %c0_i32_1 : i32, i32, i32
  }
  func.func @transform_12(%arg0: i32) -> (i32, i32, i32) {
    %c0_i32 = arith.constant 0 : i32
    %c0_i32_0 = arith.constant 0 : i32
    %c0_i32_1 = arith.constant 0 : i32
    %c0_i32_2 = arith.constant 0 : i32
    return %c0_i32, %c0_i32_0, %c0_i32_1 : i32, i32, i32
  }
  func.func @transform_13(%arg0: i32) -> (i32, i32, i32) {
    %c0_i32 = arith.constant 0 : i32
    %c0_i32_0 = arith.constant 0 : i32
    %c0_i32_1 = arith.constant 0 : i32
    return %arg0, %c0_i32, %c0_i32_0 : i32, i32, i32
  }
}

</mosaic_0001>

<llo_original>
// kernel: tpu_custom_call.1
$region0: #{tpu_custom_call.1}
  #allocation0 [shape = 'u32[]', space=smem, size = 0x4, offset = 0x4, fixed_abs, tag = 'smem constant byte address 0x4 - core index']
  #allocation1 [shape = 'u32[72,128]{1,0:T(1,128)}', space=vmem, size = 0x9000, scoped, tag = 'internal scratch']
  %s0 = inlined_call_operand.vmem [shape: f32[2,16,16], index: 0, kind: input, shape index: {}]
  %s1 = inlined_call_operand.vmem [shape: f32[2,1,16], index: 1, kind: input, shape index: {}]
  %s2 = inlined_call_operand.vmem [shape: f32[2,1,16], index: 2, kind: input, shape index: {}]
  %s3 = inlined_call_operand.vmem [shape: bf16[2,3,16,4], index: 3, kind: input, shape index: {}]
  %s4 = inlined_call_operand.vmem [shape: bf16[2,3,16,4], index: 4, kind: input, shape index: {}]
  %s5 = inlined_call_operand.vmem [shape: f32[2,1,4], index: 5, kind: input, shape index: {}]
  %s6 = inlined_call_operand.vmem [shape: f32[2,1,4], index: 6, kind: input, shape index: {}]
  %s7 = inlined_call_operand.vmem [shape: f32[2,3,1,4], index: 7, kind: input, shape index: {}]
  %s8 = inlined_call_operand.vmem [shape: f32[2,1,4], index: 8, kind: input, shape index: {}]
  %s9 = inlined_call_operand.vmem [shape: f32[2,1,4], index: 9, kind: input, shape index: {}]
  %s10 = inlined_call_operand.vmem [shape: f32[2,1,4], index: 10, kind: input, shape index: {}]
  %s11 = inlined_call_operand.vmem [shape: bf16[2,4,16], index: 11, kind: input, shape index: {}]
  %s12 = inlined_call_operand.vmem [shape: f32[2,1,16], index: 12, kind: input, shape index: {}]
  %s13 = inlined_call_operand.hbm [shape: f32[2,16,16], index: 13, kind: output, shape index: {}]
  %s14 = sld [smem:[#allocation0]]
  $region92: #{tpu_custom_call.1} parent=0
    _
  %s16 = ssub.s32 1, %s14
  %s17 = scalar_select 0, %s16, %s14
  $region1: #{tpu_custom_call.1} parent=0
    #allocation2 [shape = 'u8[16384]{0}', space=vmem, size = 0x4000, scoped, tag = 'output window, operand 0']
    #allocation3 [shape = 's32[2]{0}', space=sflag, size = 0x8, scoped, tag = 'scoped memory for tpu_custom_call.1']
    %18 = vsyncpa [#allocation3], 0
    %s19 = scalar_lea.sflag [#allocation3], 1
    %20 = vsyncpa %s19, 0
    loop: start=0, step=1, limit=4
    $region2: #{tpu_custom_call.1} parent=1 // loop_pre_header
      _
    $region3: #{tpu_custom_call.1} parent=1 // loop_header
      %s22 = sphi 0, %s26
      %p23 = scmp.ge.s32.totalorder %s22, 4
      %s32 = sphi 0, %s34
      %s35 = sphi 0, %s32
      %s36 = sphi 0, %s35
      %s52 = sphi 0, %s36
      %s56 = sphi 0, %s56
      %s58 = sphi 0, %s56
      %s59 = sphi 0, %s58
      %s73 = sphi 0, %s59
      %s77 = sphi 0, %s77
      %s79 = sphi 0, %s77
      %s80 = sphi 0, %s79
      %s94 = sphi 0, %s80
      %s98 = sphi 0, %s98
      %s100 = sphi 0, %s98
      %s101 = sphi 0, %s100
      %s115 = sphi 0, %s101
      %s119 = sphi 0, %s119
      %s121 = sphi 0, %s119
      %s122 = sphi 0, %s121
      %s136 = sphi 0, %s122
      %s140 = sphi 0, %s140
      %s142 = sphi 0, %s140
      %s143 = sphi 0, %s142
      %s157 = sphi 0, %s143
      %s161 = sphi 0, %s161
      %s163 = sphi 0, %s161
      %s164 = sphi 0, %s163
      %s178 = sphi 0, %s164
      %s182 = sphi 0, %s182
      %s184 = sphi 0, %s182
      %s185 = sphi 0, %s184
      %s199 = sphi 0, %s185
      %s203 = sphi 0, %s203
      %s205 = sphi 0, %s203
      %s206 = sphi 0, %s205
      %s220 = sphi 0, %s206
      %s224 = sphi 0, %s224
      %s226 = sphi 0, %s224
      %s227 = sphi 0, %s226
      %s241 = sphi 0, %s227
      %s245 = sphi 0, %s245
      %s247 = sphi 0, %s245
      %s248 = sphi 0, %s247
      %s262 = sphi 0, %s248
      %s266 = sphi 0, %s266
      %s268 = sphi 0, %s266
      %s269 = sphi 0, %s268
      %s283 = sphi 0, %s269
      %s287 = sphi 0, %s287
      %s289 = sphi 0, %s287
      %s290 = sphi 0, %s289
      %s304 = sphi 0, %s290
      %s310 = sphi 0, %s312
      %s313 = sphi 0, %s310
      %s314 = sphi 0, %s313
      %s330 = sphi 0, %s314
    $region4: #{tpu_custom_call.1} parent=1 // loop_header_branch
      %25 = sbr.rel (%p23) target = $region8
    $region5: #{tpu_custom_call.1} parent=1 // loop_body
      %s27 = ssub.s32 %s22, 1
      %s28 = ssub.s32 %s22, 2
      %s29 = sadd.s32 %s22, 1
      %s30 = ssub.s32 %s22, %s29
      %p31 = scmp.eq.s32.totalorder %s30, 0
      %s33 = sadd.s32 %s32, 1
      %s34 = scalar_select %p31, %s32, %s33
      %p37 = pneg %p31
      %p38 = scmp.eq.s32.totalorder %s22, 1
      %p39 = por %p37, %p38
      %p40 = scmp.ne.s32.totalorder %s32, %s35
      %p41 = scmp.eq.s32.totalorder %s22, 0
      %p42 = por %p40, %p41
      %p43 = scmp.ne.s32.totalorder %s32, %s35
      %p44 = scmp.eq.s32.totalorder %s27, 1
      %p45 = por %p43, %p44
      %p46 = scmp.ne.s32.totalorder %s35, %s36
      %p47 = scmp.eq.s32.totalorder %s27, 0
      %p48 = por %p46, %p47
      %p49 = scmp.ne.s32.totalorder %s35, %s36
      %p50 = scmp.eq.s32.totalorder %s28, 1
      %p51 = por %p49, %p50
      %p53 = scmp.ne.s32.totalorder %s36, %s52
      %p54 = scmp.eq.s32.totalorder %s28, 0
      %p55 = por %p53, %p54
      %s57 = sadd.s32 %s56, 1
      %p60 = scmp.eq.s32.totalorder %s22, 1
      %p61 = scmp.ne.s32.totalorder %s56, %s58
      %p62 = scmp.eq.s32.totalorder %s22, 0
      %p63 = por %p61, %p62
      %p64 = scmp.ne.s32.totalorder %s56, %s58
      %p65 = scmp.eq.s32.totalorder %s27, 1
      %p66 = por %p64, %p65
      %p67 = scmp.ne.s32.totalorder %s58, %s59
      %p68 = scmp.eq.s32.totalorder %s27, 0
      %p69 = por %p67, %p68
      %p70 = scmp.ne.s32.totalorder %s58, %s59
      %p71 = scmp.eq.s32.totalorder %s28, 1
      %p72 = por %p70, %p71
      %p74 = scmp.ne.s32.totalorder %s59, %s73
      %p75 = scmp.eq.s32.totalorder %s28, 0
      %p76 = por %p74, %p75
      %s78 = sadd.s32 %s77, 1
      %p81 = scmp.eq.s32.totalorder %s22, 1
      %p82 = scmp.ne.s32.totalorder %s77, %s79
      %p83 = scmp.eq.s32.totalorder %s22, 0
      %p84 = por %p82, %p83
      %p85 = scmp.ne.s32.totalorder %s77, %s79
      %p86 = scmp.eq.s32.totalorder %s27, 1
      %p87 = por %p85, %p86
      %p88 = scmp.ne.s32.totalorder %s79, %s80
      %p89 = scmp.eq.s32.totalorder %s27, 0
      %p90 = por %p88, %p89
      %p91 = scmp.ne.s32.totalorder %s79, %s80
      %p92 = scmp.eq.s32.totalorder %s28, 1
      %p93 = por %p91, %p92
      %p95 = scmp.ne.s32.totalorder %s80, %s94
      %p96 = scmp.eq.s32.totalorder %s28, 0
      %p97 = por %p95, %p96
      %s99 = sadd.s32 %s98, 1
      %p102 = scmp.eq.s32.totalorder %s22, 1
      %p103 = scmp.ne.s32.totalorder %s98, %s100
      %p104 = scmp.eq.s32.totalorder %s22, 0
      %p105 = por %p103, %p104
      %p106 = scmp.ne.s32.totalorder %s98, %s100
      %p107 = scmp.eq.s32.totalorder %s27, 1
      %p108 = por %p106, %p107
      %p109 = scmp.ne.s32.totalorder %s100, %s101
      %p110 = scmp.eq.s32.totalorder %s27, 0
      %p111 = por %p109, %p110
      %p112 = scmp.ne.s32.totalorder %s100, %s101
      %p113 = scmp.eq.s32.totalorder %s28, 1
      %p114 = por %p112, %p113
      %p116 = scmp.ne.s32.totalorder %s101, %s115
      %p117 = scmp.eq.s32.totalorder %s28, 0
      %p118 = por %p116, %p117
      %s120 = sadd.s32 %s119, 1
      %p123 = scmp.eq.s32.totalorder %s22, 1
      %p124 = scmp.ne.s32.totalorder %s119, %s121
      %p125 = scmp.eq.s32.totalorder %s22, 0
      %p126 = por %p124, %p125
      %p127 = scmp.ne.s32.totalorder %s119, %s121
      %p128 = scmp.eq.s32.totalorder %s27, 1
      %p129 = por %p127, %p128
      %p130 = scmp.ne.s32.totalorder %s121, %s122
      %p131 = scmp.eq.s32.totalorder %s27, 0
      %p132 = por %p130, %p131
      %p133 = scmp.ne.s32.totalorder %s121, %s122
      %p134 = scmp.eq.s32.totalorder %s28, 1
      %p135 = por %p133, %p134
      %p137 = scmp.ne.s32.totalorder %s122, %s136
      %p138 = scmp.eq.s32.totalorder %s28, 0
      %p139 = por %p137, %p138
      %s141 = sadd.s32 %s140, 1
      %p144 = scmp.eq.s32.totalorder %s22, 1
      %p145 = scmp.ne.s32.totalorder %s140, %s142
      %p146 = scmp.eq.s32.totalorder %s22, 0
      %p147 = por %p145, %p146
      %p148 = scmp.ne.s32.totalorder %s140, %s142
      %p149 = scmp.eq.s32.totalorder %s27, 1
      %p150 = por %p148, %p149
      %p151 = scmp.ne.s32.totalorder %s142, %s143
      %p152 = scmp.eq.s32.totalorder %s27, 0
      %p153 = por %p151, %p152
      %p154 = scmp.ne.s32.totalorder %s142, %s143
      %p155 = scmp.eq.s32.totalorder %s28, 1
      %p156 = por %p154, %p155
      %p158 = scmp.ne.s32.totalorder %s143, %s157
      %p159 = scmp.eq.s32.totalorder %s28, 0
      %p160 = por %p158, %p159
      %s162 = sadd.s32 %s161, 1
      %p165 = scmp.eq.s32.totalorder %s22, 1
      %p166 = scmp.ne.s32.totalorder %s161, %s163
      %p167 = scmp.eq.s32.totalorder %s22, 0
      %p168 = por %p166, %p167
      %p169 = scmp.ne.s32.totalorder %s161, %s163
      %p170 = scmp.eq.s32.totalorder %s27, 1
      %p171 = por %p169, %p170
      %p172 = scmp.ne.s32.totalorder %s163, %s164
      %p173 = scmp.eq.s32.totalorder %s27, 0
      %p174 = por %p172, %p173
      %p175 = scmp.ne.s32.totalorder %s163, %s164
      %p176 = scmp.eq.s32.totalorder %s28, 1
      %p177 = por %p175, %p176
      %p179 = scmp.ne.s32.totalorder %s164, %s178
      %p180 = scmp.eq.s32.totalorder %s28, 0
      %p181 = por %p179, %p180
      %s183 = sadd.s32 %s182, 1
      %p186 = scmp.eq.s32.totalorder %s22, 1
      %p187 = scmp.ne.s32.totalorder %s182, %s184
      %p188 = scmp.eq.s32.totalorder %s22, 0
      %p189 = por %p187, %p188
      %p190 = scmp.ne.s32.totalorder %s182, %s184
      %p191 = scmp.eq.s32.totalorder %s27, 1
      %p192 = por %p190, %p191
      %p193 = scmp.ne.s32.totalorder %s184, %s185
      %p194 = scmp.eq.s32.totalorder %s27, 0
      %p195 = por %p193, %p194
      %p196 = scmp.ne.s32.totalorder %s184, %s185
      %p197 = scmp.eq.s32.totalorder %s28, 1
      %p198 = por %p196, %p197
      %p200 = scmp.ne.s32.totalorder %s185, %s199
      %p201 = scmp.eq.s32.totalorder %s28, 0
      %p202 = por %p200, %p201
      %s204 = sadd.s32 %s203, 1
      %p207 = scmp.eq.s32.totalorder %s22, 1
      %p208 = scmp.ne.s32.totalorder %s203, %s205
      %p209 = scmp.eq.s32.totalorder %s22, 0
      %p210 = por %p208, %p209
      %p211 = scmp.ne.s32.totalorder %s203, %s205
      %p212 = scmp.eq.s32.totalorder %s27, 1
      %p213 = por %p211, %p212
      %p214 = scmp.ne.s32.totalorder %s205, %s206
      %p215 = scmp.eq.s32.totalorder %s27, 0
      %p216 = por %p214, %p215
      %p217 = scmp.ne.s32.totalorder %s205, %s206
      %p218 = scmp.eq.s32.totalorder %s28, 1
      %p219 = por %p217, %p218
      %p221 = scmp.ne.s32.totalorder %s206, %s220
      %p222 = scmp.eq.s32.totalorder %s28, 0
      %p223 = por %p221, %p222
      %s225 = sadd.s32 %s224, 1
      %p228 = scmp.eq.s32.totalorder %s22, 1
      %p229 = scmp.ne.s32.totalorder %s224, %s226
      %p230 = scmp.eq.s32.totalorder %s22, 0
      %p231 = por %p229, %p230
      %p232 = scmp.ne.s32.totalorder %s224, %s226
      %p233 = scmp.eq.s32.totalorder %s27, 1
      %p234 = por %p232, %p233
      %p235 = scmp.ne.s32.totalorder %s226, %s227
      %p236 = scmp.eq.s32.totalorder %s27, 0
      %p237 = por %p235, %p236
      %p238 = scmp.ne.s32.totalorder %s226, %s227
      %p239 = scmp.eq.s32.totalorder %s28, 1
      %p240 = por %p238, %p239
      %p242 = scmp.ne.s32.totalorder %s227, %s241
      %p243 = scmp.eq.s32.totalorder %s28, 0
      %p244 = por %p242, %p243
      %s246 = sadd.s32 %s245, 1
      %p249 = scmp.eq.s32.totalorder %s22, 1
      %p250 = scmp.ne.s32.totalorder %s245, %s247
      %p251 = scmp.eq.s32.totalorder %s22, 0
      %p252 = por %p250, %p251
      %p253 = scmp.ne.s32.totalorder %s245, %s247
      %p254 = scmp.eq.s32.totalorder %s27, 1
      %p255 = por %p253, %p254
      %p256 = scmp.ne.s32.totalorder %s247, %s248
      %p257 = scmp.eq.s32.totalorder %s27, 0
      %p258 = por %p256, %p257
      %p259 = scmp.ne.s32.totalorder %s247, %s248
      %p260 = scmp.eq.s32.totalorder %s28, 1
      %p261 = por %p259, %p260
      %p263 = scmp.ne.s32.totalorder %s248, %s262
      %p264 = scmp.eq.s32.totalorder %s28, 0
      %p265 = por %p263, %p264
      %s267 = sadd.s32 %s266, 1
      %p270 = scmp.eq.s32.totalorder %s22, 1
      %p271 = scmp.ne.s32.totalorder %s266, %s268
      %p272 = scmp.eq.s32.totalorder %s22, 0
      %p273 = por %p271, %p272
      %p274 = scmp.ne.s32.totalorder %s266, %s268
      %p275 = scmp.eq.s32.totalorder %s27, 1
      %p276 = por %p274, %p275
      %p277 = scmp.ne.s32.totalorder %s268, %s269
      %p278 = scmp.eq.s32.totalorder %s27, 0
      %p279 = por %p277, %p278
      %p280 = scmp.ne.s32.totalorder %s268, %s269
      %p281 = scmp.eq.s32.totalorder %s28, 1
      %p282 = por %p280, %p281
      %p284 = scmp.ne.s32.totalorder %s269, %s283
      %p285 = scmp.eq.s32.totalorder %s28, 0
      %p286 = por %p284, %p285
      %s288 = sadd.s32 %s287, 1
      %p291 = scmp.eq.s32.totalorder %s22, 1
      %p292 = scmp.ne.s32.totalorder %s287, %s289
      %p293 = scmp.eq.s32.totalorder %s22, 0
      %p294 = por %p292, %p293
      %p295 = scmp.ne.s32.totalorder %s287, %s289
      %p296 = scmp.eq.s32.totalorder %s27, 1
      %p297 = por %p295, %p296
      %p298 = scmp.ne.s32.totalorder %s289, %s290
      %p299 = scmp.eq.s32.totalorder %s27, 0
      %p300 = por %p298, %p299
      %p301 = scmp.ne.s32.totalorder %s289, %s290
      %p302 = scmp.eq.s32.totalorder %s28, 1
      %p303 = por %p301, %p302
      %p305 = scmp.ne.s32.totalorder %s290, %s304
      %p306 = scmp.eq.s32.totalorder %s28, 0
      %p307 = por %p305, %p306
      %s308 = ssub.s32 %s22, %s29
      %p309 = scmp.eq.s32.totalorder %s308, 0
      %s311 = sadd.s32 %s310, 1
      %s312 = scalar_select %p309, %s310, %s311
      %p315 = pneg %p309
      %p316 = scmp.eq.s32.totalorder %s22, 1
      %p317 = por %p315, %p316
      %p318 = scmp.ne.s32.totalorder %s310, %s313
      %p319 = scmp.eq.s32.totalorder %s22, 0
      %p320 = por %p318, %p319
      %p321 = scmp.ne.s32.totalorder %s310, %s313
      %p322 = scmp.eq.s32.totalorder %s27, 1
      %p323 = por %p321, %p322
      %p324 = scmp.ne.s32.totalorder %s313, %s314
      %p325 = scmp.eq.s32.totalorder %s27, 0
      %p326 = por %p324, %p325
      %p327 = scmp.ne.s32.totalorder %s313, %s314
      %p328 = scmp.eq.s32.totalorder %s28, 1
      %p329 = por %p327, %p328
      %p331 = scmp.ne.s32.totalorder %s314, %s330
      %p332 = scmp.eq.s32.totalorder %s28, 0
      %p333 = por %p331, %p332
      %p334 = scmp.le.s32.totalorder 1, %s22
      %p335 = scmp.lt.s32.totalorder %s22, 3
      %p336 = pnand %p334, %p335
      %p337 = pneg %p336
      // Predicated region
      $region9: #{tpu_custom_call.1} parent=5 // pred_check
        _
      $region10: #{tpu_custom_call.1} parent=5 // pred_check_branch
        %339 = sbr.rel (%p336) target = $region12
      $region11: #{tpu_custom_call.1} parent=5 // pred_region
        %s340 = ssub.s32 %s22, 1
        // Predicated region
        $region13: #{tpu_custom_call.1} parent=11 // pred_check
          %p341 = pneg %p69
        $region14: #{tpu_custom_call.1} parent=11 // pred_check_branch
          %343 = sbr.rel (%p341) target = $region16
        $region15: #{tpu_custom_call.1} parent=11 // pred_region
          _
        $region16: #{tpu_custom_call.1} parent=11 // pred_fallthru
          _
        // Predicated region
        $region17: #{tpu_custom_call.1} parent=11 // pred_check
          %p344 = pneg %p90
        $region18: #{tpu_custom_call.1} parent=11 // pred_check_branch
          %346 = sbr.rel (%p344) target = $region20
        $region19: #{tpu_custom_call.1} parent=11 // pred_region
          _
        $region20: #{tpu_custom_call.1} parent=11 // pred_fallthru
          _
        // Predicated region
        $region21: #{tpu_custom_call.1} parent=11 // pred_check
          %p347 = pneg %p111
        $region22: #{tpu_custom_call.1} parent=11 // pred_check_branch
          %349 = sbr.rel (%p347) target = $region24
        $region23: #{tpu_custom_call.1} parent=11 // pred_region
          _
        $region24: #{tpu_custom_call.1} parent=11 // pred_fallthru
          _
        // Predicated region
        $region25: #{tpu_custom_call.1} parent=11 // pred_check
          %p350 = pneg %p132
        $region26: #{tpu_custom_call.1} parent=11 // pred_check_branch
          %352 = sbr.rel (%p350) target = $region28
        $region27: #{tpu_custom_call.1} parent=11 // pred_region
          _
        $region28: #{tpu_custom_call.1} parent=11 // pred_fallthru
          _
        // Predicated region
        $region29: #{tpu_custom_call.1} parent=11 // pred_check
          %p353 = pneg %p153
        $region30: #{tpu_custom_call.1} parent=11 // pred_check_branch
          %355 = sbr.rel (%p353) target = $region32
        $region31: #{tpu_custom_call.1} parent=11 // pred_region
          _
        $region32: #{tpu_custom_call.1} parent=11 // pred_fallthru
          _
        // Predicated region
        $region33: #{tpu_custom_call.1} parent=11 // pred_check
          %p356 = pneg %p174
        $region34: #{tpu_custom_call.1} parent=11 // pred_check_branch
          %358 = sbr.rel (%p356) target = $region36
        $region35: #{tpu_custom_call.1} parent=11 // pred_region
          _
        $region36: #{tpu_custom_call.1} parent=11 // pred_fallthru
          _
        // Predicated region
        $region37: #{tpu_custom_call.1} parent=11 // pred_check
          %p359 = pneg %p195
        $region38: #{tpu_custom_call.1} parent=11 // pred_check_branch
          %361 = sbr.rel (%p359) target = $region40
        $region39: #{tpu_custom_call.1} parent=11 // pred_region
          _
        $region40: #{tpu_custom_call.1} parent=11 // pred_fallthru
          _
        // Predicated region
        $region41: #{tpu_custom_call.1} parent=11 // pred_check
          %p362 = pneg %p216
        $region42: #{tpu_custom_call.1} parent=11 // pred_check_branch
          %364 = sbr.rel (%p362) target = $region44
        $region43: #{tpu_custom_call.1} parent=11 // pred_region
          _
        $region44: #{tpu_custom_call.1} parent=11 // pred_fallthru
          _
        // Predicated region
        $region45: #{tpu_custom_call.1} parent=11 // pred_check
          %p365 = pneg %p237
        $region46: #{tpu_custom_call.1} parent=11 // pred_check_branch
          %367 = sbr.rel (%p365) target = $region48
        $region47: #{tpu_custom_call.1} parent=11 // pred_region
          _
        $region48: #{tpu_custom_call.1} parent=11 // pred_fallthru
          _
        // Predicated region
        $region49: #{tpu_custom_call.1} parent=11 // pred_check
          %p368 = pneg %p258
        $region50: #{tpu_custom_call.1} parent=11 // pred_check_branch
          %370 = sbr.rel (%p368) target = $region52
        $region51: #{tpu_custom_call.1} parent=11 // pred_region
          _
        $region52: #{tpu_custom_call.1} parent=11 // pred_fallthru
          _
        // Predicated region
        $region53: #{tpu_custom_call.1} parent=11 // pred_check
          %p371 = pneg %p279
        $region54: #{tpu_custom_call.1} parent=11 // pred_check_branch
          %373 = sbr.rel (%p371) target = $region56
        $region55: #{tpu_custom_call.1} parent=11 // pred_region
          _
        $region56: #{tpu_custom_call.1} parent=11 // pred_fallthru
          _
        // Predicated region
        $region57: #{tpu_custom_call.1} parent=11 // pred_check
          %p374 = pneg %p300
        $region58: #{tpu_custom_call.1} parent=11 // pred_check_branch
          %376 = sbr.rel (%p374) target = $region60
        $region59: #{tpu_custom_call.1} parent=11 // pred_region
          _
        $region60: #{tpu_custom_call.1} parent=11 // pred_fallthru
          _
      $region12: #{tpu_custom_call.1} parent=5 // pred_fallthru
        _
      %p377 = scmp.lt.s32.totalorder %s22, 2
      // Predicated region
      $region61: #{tpu_custom_call.1} parent=5 // pred_check
        %p378 = pneg %p377
      $region62: #{tpu_custom_call.1} parent=5 // pred_check_branch
        %380 = sbr.rel (%p378) target = $region64
      $region63: #{tpu_custom_call.1} parent=5 // pred_region
        // Predicated region
        $region65: #{tpu_custom_call.1} parent=63 // pred_check
          %p381 = pneg %p42
        $region66: #{tpu_custom_call.1} parent=63 // pred_check_branch
          %383 = sbr.rel (%p381) target = $region68
        $region67: #{tpu_custom_call.1} parent=63 // pred_region
          %p384 = scmp.lt.s32.totalorder %s22, 1
          %s385 = scalar_select %p384, %s22, 1
          %s386 = smul.addr %s385, 2
          %s387 = smul.addr %s386, 8
          %s388 = scalar_lea.vmem %s0, %s387
        $region68: #{tpu_custom_call.1} parent=63 // pred_fallthru
          _
      $region64: #{tpu_custom_call.1} parent=5 // pred_fallthru
        _
      %p389 = scmp.le.s32.totalorder 1, %s22
      %p390 = scmp.lt.s32.totalorder %s22, 3
      %p391 = pnand %p389, %p390
      %p392 = pneg %p391
      // Predicated region
      $region69: #{tpu_custom_call.1} parent=5 // pred_check
        _
      $region70: #{tpu_custom_call.1} parent=5 // pred_check_branch
        %394 = sbr.rel (%p391) target = $region72
      $region71: #{tpu_custom_call.1} parent=5 // pred_region
        %s395 = ssub.s32 %s22, 1
        %p396 = scmp.lt.s32.totalorder %s27, 1
        %s397 = scalar_select %p396, %s27, 1
        %s398 = smul.addr %s397, 2
        %s399 = smul.addr %s398, 8
        %s400 = scalar_lea.vmem %s0, %s399
        %p401 = pneg %p48
        %p402 = pneg %p45
        %p403 = pneg %p69
        %p404 = pneg %p66
        %p405 = pneg %p90
        %p406 = pneg %p87
        %p407 = pneg %p111
        %p408 = pneg %p108
        %p409 = pneg %p132
        %p410 = pneg %p129
        %p411 = pneg %p153
        %p412 = pneg %p150
        %p413 = pneg %p174
        %p414 = pneg %p171
        %p415 = pneg %p195
        %p416 = pneg %p192
        %p417 = pneg %p216
        %p418 = pneg %p213
        %p419 = pneg %p237
        %p420 = pneg %p234
        %p421 = pneg %p258
        %p422 = pneg %p255
        %p423 = pneg %p279
        %p424 = pneg %p276
        %p425 = pneg %p300
        %p426 = pneg %p297
        %p427 = pneg %p326
        %p428 = pneg %p323
        %s429 = sand.u32 %s313, 1
        %s430 = scalar_lea.sflag [#allocation3], %s429
        %s431 = sand.u32 %s313, 1
        %s432 = smul.addr %s431, 16
        %s433 = scalar_lea.vmem [#allocation2], %s432
        %p434 = scmp.lt.s32.totalorder %s27, 1
        %s435 = scalar_select %p434, %s27, 1
        %s436 = smul.addr %s435, 2
        %s437 = smul.addr %s436, 8
        %s438 = scalar_lea.vmem %s0, %s437
        %v440 = vld [vmem:[%s438] sm:$0xff]
        %v441 = vld [vmem:[%s438 + $0x8] sm:$0xff]
        %442 = vxpose.xlu0.b32.start [1/16] %v440, 128
        %443 = vxpose.xlu0.b32.cont [2/16] %v441, 128
        %444 = vxpose.xlu0.b32.cont [3/16] 0.0, 128
        %445 = vxpose.xlu0.b32.cont [4/16] 0.0, 128
        %446 = vxpose.xlu0.b32.cont [5/16] 0.0, 128
        %447 = vxpose.xlu0.b32.cont [6/16] 0.0, 128
        %448 = vxpose.xlu0.b32.cont [7/16] 0.0, 128
        %449 = vxpose.xlu0.b32.cont [8/16] 0.0, 128
        %450 = vxpose.xlu0.b32.cont [9/16] 0.0, 128
        %451 = vxpose.xlu0.b32.cont [10/16] 0.0, 128
        %452 = vxpose.xlu0.b32.cont [11/16] 0.0, 128
        %453 = vxpose.xlu0.b32.cont [12/16] 0.0, 128
        %454 = vxpose.xlu0.b32.cont [13/16] 0.0, 128
        %455 = vxpose.xlu0.b32.cont [14/16] 0.0, 128
        %456 = vxpose.xlu0.b32.cont [15/16] 0.0, 128
        %457 = vxpose.xlu0.b32.end [16/16] 0.0, 128
        %v458 = vpop.trf.xlu0
        %v459 = vpop.trf.xlu0
        %v460 = vpop.trf.xlu0
        %v461 = vpop.trf.xlu0
        %v462 = vpop.trf.xlu0
        %v463 = vpop.trf.xlu0
        %v464 = vpop.trf.xlu0
        %v465 = vpop.trf.xlu0
        %v466 = vpop.trf.xlu0
        %v467 = vpop.trf.xlu0
        %v468 = vpop.trf.xlu0
        %v469 = vpop.trf.xlu0
        %v470 = vpop.trf.xlu0
        %v471 = vpop.trf.xlu0
        %v472 = vpop.trf.xlu0
        %v473 = vpop.trf.xlu0
        %v474 = vlaneseq
        %v475 = vshrl.u32 %v474, 7
        %v476 = vadd.s32 %v475, 8
        %vm477 = vcmp.ge.s32.totalorder %v475, 1
        %vm478 = vcmp.ge.s32.totalorder %v476, 1
        %vm479 = vcmp.lt.s32.totalorder %v475, 17
        %vm480 = vcmp.lt.s32.totalorder %v476, 17
        %vm481 = vmand %vm477, %vm479
        %vm482 = vmand %vm478, %vm480
        %vm483 = vcmp.ge.s32.totalorder %v475, 0
        %vm484 = vcmp.ge.s32.totalorder %v476, 0
        %vm485 = vcmp.lt.s32.totalorder %v475, 16
        %vm486 = vcmp.lt.s32.totalorder %v476, 16
        %vm487 = vmand %vm483, %vm485
        %vm488 = vmand %vm484, %vm486
        %vm489 = vcmp.ge.s32.totalorder %v475, 4294967295
        %vm490 = vcmp.ge.s32.totalorder %v476, 4294967295
        %vm491 = vcmp.lt.s32.totalorder %v475, 15
        %vm492 = vcmp.lt.s32.totalorder %v476, 15
        %vm493 = vmand %vm489, %vm491
        %vm494 = vmand %vm490, %vm492
        loop: start=0, step=1, limit=2
        $region73: #{tpu_custom_call.1} parent=71 // loop_pre_header
          _
        $region74: #{tpu_custom_call.1} parent=71 // loop_header
          %s496 = sphi 0, %s500
          %p497 = scmp.ge.s32.totalorder %s496, 2
          %v501 = vphi %v458, %v1009
          %v502 = vphi %v459, %v1010
        $region75: #{tpu_custom_call.1} parent=71 // loop_header_branch
          %499 = sbr.rel (%p497) target = $region79
        $region76: #{tpu_custom_call.1} parent=71 // loop_body
          %vm503 = vcmask 130048
          %v504 = vsel %vm503, %v501, 0.0
          %v505 = vsel %vm503, %v502, 0.0
          %v506 = vadd.f32 %v504, %v505
          %507 = vadd.xlane.f32.xlu0 %v506
          %v508 = vpop.xlane.xlu0 %507
          %v509 = vrot.slane %v508, 4
          %v510 = vadd.f32 %v508, %v509
          %v511 = vrot.slane %v510, 2
          %v512 = vadd.f32 %v510, %v511
          %v513 = vrot.slane %v512, 1
          %v514 = vadd.f32 %v512, %v513
          %v515 = vrcp.pop 256.0
          %v516 = vmul.f32 256.0, %v515
          %v517 = vsub.f32 1.0, %v516
          %v518 = vmul.f32 %v515, %v517
          %v519 = vadd.f32 %v515, %v518
          %vm520 = vweird.f32 %v515
          %v521 = vsel %vm520, %v515, %v519
          %v522 = vmul.f32 %v514, %v521
          %v523 = vmul.f32 %v501, %v501
          %v524 = vmul.f32 %v502, %v502
          %v525 = vsel %vm503, %v523, 0.0
          %v526 = vsel %vm503, %v524, 0.0
          %v527 = vadd.f32 %v525, %v526
          %528 = vadd.xlane.f32.xlu0 %v527
          %v529 = vpop.xlane.xlu0 %528
          %v530 = vrot.slane %v529, 4
          %v531 = vadd.f32 %v529, %v530
          %v532 = vrot.slane %v531, 2
          %v533 = vadd.f32 %v531, %v532
          %v534 = vrot.slane %v533, 1
          %v535 = vadd.f32 %v533, %v534
          %v536 = vmul.f32 %v535, %v521
          %v537 = vsub.f32 %v501, %v522
          %v538 = vsub.f32 %v502, %v522
          %v539 = vmul.f32 %v522, %v522
          %v540 = vsub.f32 %v536, %v539
          %v541 = vadd.f32 %v540, 1e-05
          %v542 = vrsqrt.pop %v541
          %v543 = vmul.f32 %v542, %v541
          %v544 = vmul.f32 %v543, %v542
          %v545 = vmul.f32 0.5, %v544
          %v546 = vsub.f32 1.5, %v545
          %v547 = vmul.f32 %v542, %v546
          %vm548 = vweird.f32 %v541
          %vm549 = vweird.f32 %v542
          %vm550 = vmor %vm548, %vm549
          %v551 = vsel %vm550, %v542, %v547
          %v552 = vmul.f32 %v537, %v551
          %v553 = vmul.f32 %v538, %v551
          %s554 = scalar_lea.vmem %s1, %s496
          %v555 = vld [vmem:[%s554] sm:$0x1]
          %v557 = vperm.slane %v555, 0
          %v559 = vmul.f32 %v552, %v557
          %v560 = vmul.f32 %v553, %v557
          %s561 = scalar_lea.vmem %s2, %s496
          %v562 = vld [vmem:[%s561] sm:$0x1]
          %v564 = vperm.slane %v562, 0
          %v566 = vadd.f32 %v559, %v564
          %v567 = vadd.f32 %v560, %v564
          %s568 = smul.u32 %s496, 6
          %s569 = smul.addr %s568, 4
          %s570 = scalar_lea.vmem %s3, %s569
          %v571 = vld [vmem:[%s570] sm:$0xf]
          %v572 = vld [vmem:[%s570 + $0x4] sm:$0xf]
          %v573 = vld [vmem:[%s570 + $0x8] sm:$0xf]
          %v574 = vld [vmem:[%s570 + $0xc] sm:$0xf]
          %v575 = vld [vmem:[%s570 + $0x10] sm:$0xf]
          %v576 = vld [vmem:[%s570 + $0x14] sm:$0xf]
          %s577 = smul.addr %s568, 4
          %s578 = scalar_lea.vmem %s4, %s577
          %v579 = vld [vmem:[%s578] sm:$0xf]
          %v580 = vld [vmem:[%s578 + $0x4] sm:$0xf]
          %v581 = vld [vmem:[%s578 + $0x8] sm:$0xf]
          %v582 = vld [vmem:[%s578 + $0xc] sm:$0xf]
          %v583 = vld [vmem:[%s578 + $0x10] sm:$0xf]
          %v584 = vld [vmem:[%s578 + $0x14] sm:$0xf]
          %v585 = vrot.slane %v566, 7
          %v586 = vrot.slane %v567, 7
          %vm587 = vcmp.lt.s32.totalorder %v475, 1
          %v588 = vsel %vm587, %v585, %v586
          %v589 = vsel %vm587, %v586, %v585
          %v590 = vsel %vm481, 1, 0
          %v591 = vsel %vm482, 1, 0
          %vm592 = vcmp.eq.s32.totalorder %v590, 1
          %vm593 = vcmp.eq.s32.totalorder %v591, 1
          %v594 = vsel %vm592, %v589, 0.0
          %v595 = vsel %vm593, %v588, 0.0
          %v596 = vpack.c.bf16 %v594, %v594
          %v597 = vpack.c.bf16 %v595, %v595
          %v598 = vsel %vm487, 1, 0
          %v599 = vsel %vm488, 1, 0
          %vm600 = vcmp.eq.s32.totalorder %v598, 1
          %vm601 = vcmp.eq.s32.totalorder %v599, 1
          %v602 = vsel %vm600, %v566, 0.0
          %v603 = vsel %vm601, %v567, 0.0
          %v604 = vpack.c.bf16 %v602, %v602
          %v605 = vpack.c.bf16 %v603, %v603
          %v608 = vunpack.c.l.b16 %v604
          %v609 = vunpack.c.l.b16 %v605
          %v610 = vpack.c.b16 %v609, %v608
          %v613 = vunpack.c.l.b16 %v573
          %v614 = vunpack.c.l.b16 %v574
          %v615 = vpack.c.b16 %v614, %v613
          %v618 = vsel %vm503, %v610, 0
          %620 = vmatpush.bf16.msra.mxu0 0
          %621 = vmatpush.bf16.msra.mxu0 0
          %622 = vmatpush.bf16.msra.mxu0 0
          %623 = vmatpush.bf16.msra.mxu0 0
          %624 = vmatpush.bf16.msra.mxu0 0
          %625 = vmatpush.bf16.msra.mxu0 0
          %626 = vmatpush.bf16.msra.mxu0 0
          %627 = vmatpush.bf16.msra.mxu0 %v615
          %628 = vmatmul.bf16.gmra.mxu0 %v618
          %v629 = vpop.f32.mrf.mxu0
          %v630 = vadd.f32 0.0, %v629
          %v631 = vpop.f32.mrf.mxu0
          %v632 = vadd.f32 0.0, %v631
          %633 = vdwg.mxu0
          %v636 = vunpack.c.l.b16 %v581
          %v637 = vunpack.c.l.b16 %v582
          %v638 = vpack.c.b16 %v637, %v636
          %640 = vmatpush.bf16.msra.mxu0 0
          %641 = vmatpush.bf16.msra.mxu0 0
          %642 = vmatpush.bf16.msra.mxu0 0
          %643 = vmatpush.bf16.msra.mxu0 0
          %644 = vmatpush.bf16.msra.mxu0 0
          %645 = vmatpush.bf16.msra.mxu0 0
          %646 = vmatpush.bf16.msra.mxu0 0
          %647 = vmatpush.bf16.msra.mxu0 %v638
          %648 = vmatmul.bf16.gmra.mxu0 %v618
          %v649 = vpop.f32.mrf.mxu0
          %v650 = vadd.f32 0.0, %v649
          %v651 = vpop.f32.mrf.mxu0
          %v652 = vadd.f32 0.0, %v651
          %653 = vdwg.mxu0
          %v656 = vunpack.c.l.b16 %v596
          %v657 = vunpack.c.l.b16 %v597
          %v658 = vpack.c.b16 %v657, %v656
          %v661 = vunpack.c.l.b16 %v571
          %v662 = vunpack.c.l.b16 %v572
          %v663 = vpack.c.b16 %v662, %v661
          %v666 = vsel %vm503, %v658, 0
          %668 = vmatpush.bf16.msra.mxu0 0
          %669 = vmatpush.bf16.msra.mxu0 0
          %670 = vmatpush.bf16.msra.mxu0 0
          %671 = vmatpush.bf16.msra.mxu0 0
          %672 = vmatpush.bf16.msra.mxu0 0
          %673 = vmatpush.bf16.msra.mxu0 0
          %674 = vmatpush.bf16.msra.mxu0 0
          %675 = vmatpush.bf16.msra.mxu0 %v663
          %676 = vmatmul.bf16.gmra.mxu0 %v666
          %v677 = vpop.f32.mrf.mxu0
          %v678 = vadd.f32 %v630, %v677
          %v679 = vpop.f32.mrf.mxu0
          %v680 = vadd.f32 %v632, %v679
          %681 = vdwg.mxu0
          %v684 = vunpack.c.l.b16 %v579
          %v685 = vunpack.c.l.b16 %v580
          %v686 = vpack.c.b16 %v685, %v684
          %688 = vmatpush.bf16.msra.mxu0 0
          %689 = vmatpush.bf16.msra.mxu0 0
          %690 = vmatpush.bf16.msra.mxu0 0
          %691 = vmatpush.bf16.msra.mxu0 0
          %692 = vmatpush.bf16.msra.mxu0 0
          %693 = vmatpush.bf16.msra.mxu0 0
          %694 = vmatpush.bf16.msra.mxu0 0
          %695 = vmatpush.bf16.msra.mxu0 %v686
          %696 = vmatmul.bf16.gmra.mxu0 %v666
          %v697 = vpop.f32.mrf.mxu0
          %v698 = vadd.f32 %v650, %v697
          %v699 = vpop.f32.mrf.mxu0
          %v700 = vadd.f32 %v652, %v699
          %701 = vdwg.mxu0
          %v702 = vrot.slane %v566, 1
          %v703 = vrot.slane %v567, 1
          %vm704 = vcmp.lt.s32.totalorder %v475, 7
          %v705 = vsel %vm704, %v702, %v703
          %v706 = vsel %vm704, %v703, %v702
          %v707 = vsel %vm493, 1, 0
          %v708 = vsel %vm494, 1, 0
          %vm709 = vcmp.eq.s32.totalorder %v707, 1
          %vm710 = vcmp.eq.s32.totalorder %v708, 1
          %v711 = vsel %vm709, %v705, 0.0
          %v712 = vsel %vm710, %v706, 0.0
          %v713 = vpack.c.bf16 %v711, %v711
          %v714 = vpack.c.bf16 %v712, %v712
          %v717 = vunpack.c.l.b16 %v713
          %v718 = vunpack.c.l.b16 %v714
          %v719 = vpack.c.b16 %v718, %v717
          %v722 = vunpack.c.l.b16 %v575
          %v723 = vunpack.c.l.b16 %v576
          %v724 = vpack.c.b16 %v723, %v722
          %v727 = vsel %vm503, %v719, 0
          %729 = vmatpush.bf16.msra.mxu0 0
          %730 = vmatpush.bf16.msra.mxu0 0
          %731 = vmatpush.bf16.msra.mxu0 0
          %732 = vmatpush.bf16.msra.mxu0 0
          %733 = vmatpush.bf16.msra.mxu0 0
          %734 = vmatpush.bf16.msra.mxu0 0
          %735 = vmatpush.bf16.msra.mxu0 0
          %736 = vmatpush.bf16.msra.mxu0 %v724
          %737 = vmatmul.bf16.gmra.mxu0 %v727
          %v738 = vpop.f32.mrf.mxu0
          %v739 = vadd.f32 0.0, %v738
          %v740 = vpop.f32.mrf.mxu0
          %v741 = vadd.f32 0.0, %v740
          %742 = vdwg.mxu0
          %v745 = vunpack.c.l.b16 %v583
          %v746 = vunpack.c.l.b16 %v584
          %v747 = vpack.c.b16 %v746, %v745
          %749 = vmatpush.bf16.msra.mxu0 0
          %750 = vmatpush.bf16.msra.mxu0 0
          %751 = vmatpush.bf16.msra.mxu0 0
          %752 = vmatpush.bf16.msra.mxu0 0
          %753 = vmatpush.bf16.msra.mxu0 0
          %754 = vmatpush.bf16.msra.mxu0 0
          %755 = vmatpush.bf16.msra.mxu0 0
          %756 = vmatpush.bf16.msra.mxu0 %v747
          %757 = vmatmul.bf16.gmra.mxu0 %v727
          %v758 = vpop.f32.mrf.mxu0
          %v759 = vadd.f32 0.0, %v758
          %v760 = vpop.f32.mrf.mxu0
          %v761 = vadd.f32 0.0, %v760
          %762 = vdwg.mxu0
          %v763 = vadd.f32 %v678, %v739
          %v764 = vadd.f32 %v680, %v741
          %v765 = vadd.f32 %v698, %v759
          %v766 = vadd.f32 %v700, %v761
          %s767 = scalar_lea.vmem %s5, %s496
          %v768 = vld [vmem:[%s767] sm:$0x1]
          %v770 = vperm.slane %v768, 0
          %v772 = vadd.f32 %v763, %v770
          %v773 = vadd.f32 %v764, %v770
          %s774 = scalar_lea.vmem %s6, %s496
          %v775 = vld [vmem:[%s774] sm:$0x1]
          %v777 = vperm.slane %v775, 0
          %v779 = vadd.f32 %v765, %v777
          %v780 = vadd.f32 %v766, %v777
          %v781 = vxor.u32 %v779, 2147483648
          %v782 = vxor.u32 %v780, 2147483648
          %v783 = vmul.f32 %v781, 1.442695
          %v784 = vpow.pop %v783
          %v785 = vmul.f32 %v782, 1.442695
          %v786 = vpow.pop %v785
          %v787 = vadd.f32 %v784, 1.0
          %v788 = vadd.f32 %v786, 1.0
          %v789 = vrcp.pop %v787
          %v790 = vmul.f32 %v787, %v789
          %v791 = vsub.f32 1.0, %v790
          %v792 = vmul.f32 %v789, %v791
          %v793 = vadd.f32 %v789, %v792
          %vm794 = vweird.f32 %v787
          %vm795 = vweird.f32 %v789
          %vm796 = vmor %vm794, %vm795
          %v797 = vsel %vm796, %v789, %v793
          %v798 = vand.u32 2147483647, %v787
          %vm799 = vcmp.eq.f32.partialorder %v798, 8.507059e+37
          %v800 = vand.u32 %v787, 2147483648
          %v801 = vor.u32 1.1754944e-38, %v800
          %v802 = vsel %vm799, %v801, %v797
          %v803 = vmul.f32 1.0, %v802
          %v804 = vrcp.pop %v788
          %v805 = vmul.f32 %v788, %v804
          %v806 = vsub.f32 1.0, %v805
          %v807 = vmul.f32 %v804, %v806
          %v808 = vadd.f32 %v804, %v807
          %vm809 = vweird.f32 %v788
          %vm810 = vweird.f32 %v804
          %vm811 = vmor %vm809, %vm810
          %v812 = vsel %vm811, %v804, %v808
          %v813 = vand.u32 2147483647, %v788
          %vm814 = vcmp.eq.f32.partialorder %v813, 8.507059e+37
          %v815 = vand.u32 %v788, 2147483648
          %v816 = vor.u32 1.1754944e-38, %v815
          %v817 = vsel %vm814, %v816, %v812
          %v818 = vmul.f32 1.0, %v817
          %v819 = vmul.f32 %v772, %v803
          %v820 = vmul.f32 %v773, %v818
          %s821 = smul.u32 %s496, 3
          %s822 = scalar_lea.vmem %s7, %s821
          %v823 = vld [vmem:[%s822] sm:$0x1]
          %v824 = vld [vmem:[%s822 + $0x1] sm:$0x1]
          %v825 = vld [vmem:[%s822 + $0x2] sm:$0x1]
          %v826 = vrot.slane %v819, 7
          %v827 = vrot.slane %v820, 7
          %v828 = vsel %vm587, %v826, %v827
          %v829 = vsel %vm587, %v827, %v826
          %v830 = vsel %vm592, %v829, 0.0
          %v831 = vsel %vm593, %v828, 0.0
          %v833 = vperm.slane %v823, 0
          %v835 = vmul.f32 %v830, %v833
          %v836 = vmul.f32 %v831, %v833
          %v837 = vsel %vm600, %v819, 0.0
          %v838 = vsel %vm601, %v820, 0.0
          %v840 = vperm.slane %v824, 0
          %v842 = vmul.f32 %v837, %v840
          %v843 = vmul.f32 %v838, %v840
          %v844 = vadd.f32 %v835, %v842
          %v845 = vadd.f32 %v836, %v843
          %v846 = vrot.slane %v819, 1
          %v847 = vrot.slane %v820, 1
          %v848 = vsel %vm704, %v846, %v847
          %v849 = vsel %vm704, %v847, %v846
          %v850 = vsel %vm709, %v848, 0.0
          %v851 = vsel %vm710, %v849, 0.0
          %v853 = vperm.slane %v825, 0
          %v855 = vmul.f32 %v850, %v853
          %v856 = vmul.f32 %v851, %v853
          %v857 = vadd.f32 %v844, %v855
          %v858 = vadd.f32 %v845, %v856
          %s859 = scalar_lea.vmem %s8, %s496
          %v860 = vld [vmem:[%s859] sm:$0x1]
          %v862 = vperm.slane %v860, 0
          %v864 = vadd.f32 %v857, %v862
          %v865 = vadd.f32 %v858, %v862
          %vm866 = vcmask 31744
          %v867 = vsel %vm866, %v864, 0.0
          %v868 = vsel %vm866, %v865, 0.0
          %v869 = vadd.f32 %v867, %v868
          %870 = vadd.xlane.f32.xlu0 %v869
          %v871 = vpop.xlane.xlu0 %870
          %v872 = vrot.slane %v871, 4
          %v873 = vadd.f32 %v871, %v872
          %v874 = vrot.slane %v873, 2
          %v875 = vadd.f32 %v873, %v874
          %v876 = vrot.slane %v875, 1
          %v877 = vadd.f32 %v875, %v876
          %v878 = vrcp.pop 64.0
          %v879 = vmul.f32 64.0, %v878
          %v880 = vsub.f32 1.0, %v879
          %v881 = vmul.f32 %v878, %v880
          %v882 = vadd.f32 %v878, %v881
          %vm883 = vweird.f32 %v878
          %v884 = vsel %vm883, %v878, %v882
          %v885 = vmul.f32 %v877, %v884
          %v886 = vmul.f32 %v864, %v864
          %v887 = vmul.f32 %v865, %v865
          %v888 = vsel %vm866, %v886, 0.0
          %v889 = vsel %vm866, %v887, 0.0
          %v890 = vadd.f32 %v888, %v889
          %891 = vadd.xlane.f32.xlu0 %v890
          %v892 = vpop.xlane.xlu0 %891
          %v893 = vrot.slane %v892, 4
          %v894 = vadd.f32 %v892, %v893
          %v895 = vrot.slane %v894, 2
          %v896 = vadd.f32 %v894, %v895
          %v897 = vrot.slane %v896, 1
          %v898 = vadd.f32 %v896, %v897
          %v899 = vmul.f32 %v898, %v884
          %v900 = vsub.f32 %v864, %v885
          %v901 = vsub.f32 %v865, %v885
          %v902 = vmul.f32 %v885, %v885
          %v903 = vsub.f32 %v899, %v902
          %v904 = vadd.f32 %v903, 1e-05
          %v905 = vrsqrt.pop %v904
          %v906 = vmul.f32 %v905, %v904
          %v907 = vmul.f32 %v906, %v905
          %v908 = vmul.f32 0.5, %v907
          %v909 = vsub.f32 1.5, %v908
          %v910 = vmul.f32 %v905, %v909
          %vm911 = vweird.f32 %v904
          %vm912 = vweird.f32 %v905
          %vm913 = vmor %vm911, %vm912
          %v914 = vsel %vm913, %v905, %v910
          %v915 = vmul.f32 %v900, %v914
          %v916 = vmul.f32 %v901, %v914
          %s917 = scalar_lea.vmem %s9, %s496
          %v918 = vld [vmem:[%s917] sm:$0x1]
          %v920 = vperm.slane %v918, 0
          %v922 = vmul.f32 %v915, %v920
          %v923 = vmul.f32 %v916, %v920
          %s924 = scalar_lea.vmem %s10, %s496
          %v925 = vld [vmem:[%s924] sm:$0x1]
          %v927 = vperm.slane %v925, 0
          %v929 = vadd.f32 %v922, %v927
          %v930 = vadd.f32 %v923, %v927
          %v931 = vxor.u32 %v929, 2147483648
          %v932 = vxor.u32 %v930, 2147483648
          %v933 = vmul.f32 %v931, 1.442695
          %v934 = vpow.pop %v933
          %v935 = vmul.f32 %v932, 1.442695
          %v936 = vpow.pop %v935
          %v937 = vadd.f32 %v934, 1.0
          %v938 = vadd.f32 %v936, 1.0
          %v939 = vrcp.pop %v937
          %v940 = vmul.f32 %v937, %v939
          %v941 = vsub.f32 1.0, %v940
          %v942 = vmul.f32 %v939, %v941
          %v943 = vadd.f32 %v939, %v942
          %vm944 = vweird.f32 %v937
          %vm945 = vweird.f32 %v939
          %vm946 = vmor %vm944, %vm945
          %v947 = vsel %vm946, %v939, %v943
          %v948 = vand.u32 2147483647, %v937
          %vm949 = vcmp.eq.f32.partialorder %v948, 8.507059e+37
          %v950 = vand.u32 %v937, 2147483648
          %v951 = vor.u32 1.1754944e-38, %v950
          %v952 = vsel %vm949, %v951, %v947
          %v953 = vmul.f32 1.0, %v952
          %v954 = vrcp.pop %v938
          %v955 = vmul.f32 %v938, %v954
          %v956 = vsub.f32 1.0, %v955
          %v957 = vmul.f32 %v954, %v956
          %v958 = vadd.f32 %v954, %v957
          %vm959 = vweird.f32 %v938
          %vm960 = vweird.f32 %v954
          %vm961 = vmor %vm959, %vm960
          %v962 = vsel %vm961, %v954, %v958
          %v963 = vand.u32 2147483647, %v938
          %vm964 = vcmp.eq.f32.partialorder %v963, 8.507059e+37
          %v965 = vand.u32 %v938, 2147483648
          %v966 = vor.u32 1.1754944e-38, %v965
          %v967 = vsel %vm964, %v966, %v962
          %v968 = vmul.f32 1.0, %v967
          %v969 = vmul.f32 %v929, %v953
          %v970 = vmul.f32 %v930, %v968
          %v971 = vpack.c.bf16 %v969, %v969
          %v972 = vpack.c.bf16 %v970, %v970
          %s973 = smul.addr %s496, 2
          %s974 = scalar_lea.vmem %s11, %s973
          %v975 = vld [vmem:[%s974] sm:$0x3]
          %v978 = vunpack.c.l.b16 %v971
          %v979 = vunpack.c.l.b16 %v972
          %v980 = vpack.c.b16 %v979, %v978
          %v982 = vsel %vm866, %v980, 0
          %vm984 = vcmask 1041408
          %v986 = vsel %vm984, %v975, 0
          %988 = vmatpush.bf16.msra.mxu0 0
          %989 = vmatpush.bf16.msra.mxu0 0
          %990 = vmatpush.bf16.msra.mxu0 0
          %991 = vmatpush.bf16.msra.mxu0 0
          %992 = vmatpush.bf16.msra.mxu0 0
          %993 = vmatpush.bf16.msra.mxu0 0
          %994 = vmatpush.bf16.msra.mxu0 0
          %995 = vmatpush.bf16.msra.mxu0 %v986
          %996 = vmatmul.bf16.gmra.mxu0 %v982
          %v997 = vpop.f32.mrf.mxu0
          %v998 = vadd.f32 0.0, %v997
          %v999 = vpop.f32.mrf.mxu0
          %v1000 = vadd.f32 0.0, %v999
          %1001 = vdwg.mxu0
          %v1002 = vadd.f32 %v501, %v998
          %v1003 = vadd.f32 %v502, %v1000
          %s1004 = scalar_lea.vmem %s12, %s496
          %v1005 = vld [vmem:[%s1004] sm:$0x1]
          %v1007 = vperm.slane %v1005, 0
          %v1009 = vadd.f32 %v1002, %v1007
          %v1010 = vadd.f32 %v1003, %v1007
        $region77: #{tpu_custom_call.1} parent=71 // loop_footer
          %s500 = sadd.s32 1, %s496
        $region78: #{tpu_custom_call.1} parent=71 // loop_footer_branch
          %495 = sbr.rel target = $region74
        $region79: #{tpu_custom_call.1} parent=71 // loop_exit
          _
        %1011 = vxpose.xlu0.b32.start [1/16] %v501, 128
        %1012 = vxpose.xlu0.b32.cont [2/16] %v502, 128
        %1013 = vxpose.xlu0.b32.cont [3/16] 0.0, 128
        %1014 = vxpose.xlu0.b32.cont [4/16] 0.0, 128
        %1015 = vxpose.xlu0.b32.cont [5/16] 0.0, 128
        %1016 = vxpose.xlu0.b32.cont [6/16] 0.0, 128
        %1017 = vxpose.xlu0.b32.cont [7/16] 0.0, 128
        %1018 = vxpose.xlu0.b32.cont [8/16] 0.0, 128
        %1019 = vxpose.xlu0.b32.cont [9/16] 0.0, 128
        %1020 = vxpose.xlu0.b32.cont [10/16] 0.0, 128
        %1021 = vxpose.xlu0.b32.cont [11/16] 0.0, 128
        %1022 = vxpose.xlu0.b32.cont [12/16] 0.0, 128
        %1023 = vxpose.xlu0.b32.cont [13/16] 0.0, 128
        %1024 = vxpose.xlu0.b32.cont [14/16] 0.0, 128
        %1025 = vxpose.xlu0.b32.cont [15/16] 0.0, 128
        %1026 = vxpose.xlu0.b32.end [16/16] 0.0, 128
        %v1027 = vpop.trf.xlu0
        %v1028 = vpop.trf.xlu0
        %v1029 = vpop.trf.xlu0
        %v1030 = vpop.trf.xlu0
        %v1031 = vpop.trf.xlu0
        %v1032 = vpop.trf.xlu0
        %v1033 = vpop.trf.xlu0
        %v1034 = vpop.trf.xlu0
        %v1035 = vpop.trf.xlu0
        %v1036 = vpop.trf.xlu0
        %v1037 = vpop.trf.xlu0
        %v1038 = vpop.trf.xlu0
        %v1039 = vpop.trf.xlu0
        %v1040 = vpop.trf.xlu0
        %v1041 = vpop.trf.xlu0
        %v1042 = vpop.trf.xlu0
        %vm1043 = vcmask 130048
        %1044 = vst.msk [vmem:[%s433] sm:$0xff] %vm1043, %v1027
        %1045 = vst.msk [vmem:[%s433 + $0x8] sm:$0xff] %vm1043, %v1028
        %s1046 = sand.u32 %s313, 1
        %s1047 = scalar_lea.sflag [#allocation3], %s1046
        %s1048 = sand.u32 %s313, 1
        %s1049 = smul.addr %s1048, 16
        %s1050 = scalar_lea.vmem [#allocation2], %s1049
        // Predicated region
        $region80: #{tpu_custom_call.1} parent=71 // pred_check
          %p1051 = pneg %p323
        $region81: #{tpu_custom_call.1} parent=71 // pred_check_branch
          %1053 = sbr.rel (%p1051) target = $region83
        $region82: #{tpu_custom_call.1} parent=71 // pred_region
          %1055 = vsyncadd %s1047, 0
          %s1056 = smul.addr %s27, 2
          %s1057 = smul.addr %s1056, 8
          %s1058 = scalar_lea.hbm %s13, %s1057
          %s1059 = sshll.u32 %s1050, 4
          %s1060 = int_to_ptr.vmem [resolvable:$true] %s1059
          %s1061 = sshll.u32 %s1058, 4
          %s1062 = int_to_ptr.hbm [resolvable:$true] %s1061
          %1067 = dma.vmem_to_hbm [thread:$0]  %s1060, 256, %s1062, %s1047, 128, 128, 8
        $region83: #{tpu_custom_call.1} parent=71 // pred_fallthru
          _
      $region72: #{tpu_custom_call.1} parent=5 // pred_fallthru
        _
      %p1068 = scmp.le.s32.totalorder 2, %s22
      // Predicated region
      $region84: #{tpu_custom_call.1} parent=5 // pred_check
        %p1069 = pneg %p1068
      $region85: #{tpu_custom_call.1} parent=5 // pred_check_branch
        %1071 = sbr.rel (%p1069) target = $region87
      $region86: #{tpu_custom_call.1} parent=5 // pred_region
        %s1072 = ssub.s32 %s22, 2
        // Predicated region
        $region88: #{tpu_custom_call.1} parent=86 // pred_check
          %p1073 = pneg %p329
        $region89: #{tpu_custom_call.1} parent=86 // pred_check_branch
          %1075 = sbr.rel (%p1073) target = $region91
        $region90: #{tpu_custom_call.1} parent=86 // pred_region
          %s1076 = sand.u32 %s314, 1
          %s1077 = scalar_lea.sflag [#allocation3], %s1076
          %s1078 = sand.u32 %s314, 1
          %s1079 = smul.addr %s1078, 16
          %s1080 = scalar_lea.vmem [#allocation2], %s1079
          %1082 = dma.done %s1077, 256
        $region91: #{tpu_custom_call.1} parent=86 // pred_fallthru
          _
      $region87: #{tpu_custom_call.1} parent=5 // pred_fallthru
        _
    $region6: #{tpu_custom_call.1} parent=1 // loop_footer
      %s26 = sadd.s32 1, %s22
    $region7: #{tpu_custom_call.1} parent=1 // loop_footer_branch
      %21 = sbr.rel target = $region3
    $region8: #{tpu_custom_call.1} parent=1 // loop_exit
      _
    %1083 = vsyncpa [#allocation3], 1
    %s1084 = scalar_lea.sflag [#allocation3], 1
    %1085 = vsyncpa %s1084, 1

</llo_original>
